<compile_context>
chip_gen: v7x
topology: tpu7x:2x2x1
jax: 0.10.0
libtpu: 0.0.40
codegen_flags: <defaults>
</compile_context>

<pallas_src>
import math
import functools

import jax
import jax.numpy as jnp
import numpy as np
from jax.experimental import pallas as pl
from jax.experimental.pallas import tpu as pltpu


def _make_kernel(cur, total, n_heads, dim_inner):
    hd = n_heads * dim_inner

    def kernel(x_ref, xm_ref, p_ref, wq_ref, wkv_ref, wout_ref, u_ref, v_ref,
               out_ref, av_ref):
        f32 = jnp.float32
        bf16 = jnp.bfloat16
        nn = (((1,), (0,)), ((), ()))   # (m,k) x (k,n) -> (m,n)
        nt = (((1,), (1,)), ((), ()))   # (m,k) x (n,k) -> (m,n)

        x2d = x_ref[0]                  # (cur,   Din) bf16  current tokens, this batch
        xm2d = xm_ref[0]                # (total, Din) bf16  [memory; current]

        # ---- fused projections: 2 wide MXU passes instead of 3*H tiny ones ----
        q_all = jax.lax.dot_general(x2d, wq_ref[...], nn,
                                    preferred_element_type=f32)       # (cur, H*D), pre-scaled
        kv_bf = jax.lax.dot_general(xm2d, wkv_ref[...], nn,
                                    preferred_element_type=f32).astype(bf16)  # (total, 2*H*D)

        qu_bf = (q_all + u_ref[...]).astype(bf16)   # (cur, H*D); u/v carry the 1/sqrt(d) scale
        qv_bf = (q_all + v_ref[...]).astype(bf16)

        for h in range(n_heads):
            ksl = slice(h * dim_inner, (h + 1) * dim_inner)
            vsl = slice(hd + h * dim_inner, hd + (h + 1) * dim_inner)

            # positional scores for this head: (cur, total)
            pos_h = jax.lax.dot_general(qv_bf[:, ksl], p_ref[h], nt,
                                        preferred_element_type=f32)

            # ---- exact Transformer-XL relative shift (torch zero-pad + reshape
            # semantics, incl. the wrap of query row i's tail into row i+1).
            # Each output row is a single static slice/concat, so every element is
            # moved exactly once; no selects, no iota, no row-index side input.
            rows = []
            for i in range(cur):
                s = cur - 1 - i
                if s == 0:
                    rows.append(pos_h[i:i + 1, :])
                else:
                    pieces = [pos_h[i:i + 1, s:], jnp.zeros((1, 1), f32)]
                    if s > 1:
                        pieces.append(pos_h[i + 1:i + 2, :s - 1])
                    rows.append(jnp.concatenate(pieces, axis=1))
            shifted_h = jnp.concatenate(rows, axis=0)                  # (cur, total)
            # TODO(synk): for large cur/total replace this per-row assembly with a
            #             single strided pltpu.roll over [pos | 0 | pos_next] lanes.

            # content scores + softmax (f32), attention @ values (bf16 MXU)
            content_h = jax.lax.dot_general(qu_bf[:, ksl], kv_bf[:, ksl], nt,
                                            preferred_element_type=f32)  # (cur, total)
            logits = content_h + shifted_h
            m = jnp.max(logits, axis=1, keepdims=True)
            e = jnp.exp(logits - m)
            denom = jnp.sum(e, axis=1, keepdims=True)
            attn_bf = (e * pl.reciprocal(denom, approx=True)).astype(bf16)
            # TODO(synk): optional boolean `mask` (masked_fill -inf) and the two
            #             dropout layers are not wired in (mask=None / eval path).

            av_h = jax.lax.dot_general(attn_bf, kv_bf[:, vsl], nn,
                                       preferred_element_type=f32)       # (cur, D)
            av_ref[:, h * dim_inner:(h + 1) * dim_inner] = av_h

        # ---- fused output projection: one (cur,H*D) x (H*D,Din) matmul ----
        out = jax.lax.dot_general(av_ref[...].astype(bf16), wout_ref[...], nn,
                                  preferred_element_type=f32)            # (cur, Din)
        out_ref[...] = out[None, :, :].astype(out_ref.dtype)

    return kernel


@functools.partial(jax.jit, static_argnames=("n_heads", "dim_inner"))
def multi_head_attention_xl(x, pos_emb, memory, u, v, params, *, n_heads, dim_inner):
    """x: (cur, B, Din), pos_emb: (cur+pre, Din), memory: (pre, B, Din),
    u/v: (n_heads, dim_inner). Returns (cur, B, Din)."""
    cur, batch, dim_input = x.shape
    pre = memory.shape[0]
    total = cur + pre
    hd = n_heads * dim_inner
    scale = 1.0 / math.sqrt(dim_inner)
    f32 = jnp.float32
    bf16 = jnp.bfloat16

    # Batch-major 3-D inputs; one grid step per batch element.
    x3 = jnp.transpose(x, (1, 0, 2)).astype(bf16)                        # (B, cur,   Din)
    xm = jnp.concatenate([memory, x], axis=0)                            # (total, B, Din)
    xm3 = jnp.transpose(xm, (1, 0, 2)).astype(bf16)                      # (B, total, Din)

    # Fold 1/sqrt(d) into the query path; bf16 MXU operands, f32 accumulation.
    wq_all = (params["wq"] * scale).astype(bf16)                         # (Din, H*D)
    wkv_all = params["wkv"].astype(bf16)                                 # (Din, 2*H*D)
    wout = params["wout"].astype(bf16)                                   # (H*D, Din)
    u_row = (u.reshape(1, hd) * scale).astype(f32)
    v_row = (v.reshape(1, hd) * scale).astype(f32)

    # Batch-independent position projection, computed once outside the kernel.
    p3 = (pos_emb.astype(f32) @ params["wpos"]).reshape(total, n_heads, dim_inner)
    p3 = jnp.transpose(p3, (1, 0, 2)).astype(bf16)                       # (H, total, D)

    kernel = _make_kernel(cur, total, n_heads, dim_inner)

    out3 = pl.pallas_call(
        kernel,
        out_shape=jax.ShapeDtypeStruct((batch, cur, dim_input), f32),
        grid_spec=pltpu.PrefetchScalarGridSpec(
            num_scalar_prefetch=0,
            grid=(batch,),
            in_specs=[
                pl.BlockSpec((1, cur, dim_input), lambda b: (b, 0, 0)),           # x3
                pl.BlockSpec((1, total, dim_input), lambda b: (b, 0, 0)),         # xm3
                pl.BlockSpec((n_heads, total, dim_inner), lambda b: (0, 0, 0)),   # p3
                pl.BlockSpec((dim_input, hd), lambda b: (0, 0)),                  # wq
                pl.BlockSpec((dim_input, 2 * hd), lambda b: (0, 0)),              # wkv
                pl.BlockSpec((hd, dim_input), lambda b: (0, 0)),                  # wout
                pl.BlockSpec((1, hd), lambda b: (0, 0)),                          # u
                pl.BlockSpec((1, hd), lambda b: (0, 0)),                          # v
            ],
            out_specs=pl.BlockSpec((1, cur, dim_input), lambda b: (b, 0, 0)),
            scratch_shapes=[pltpu.VMEM((cur, hd), jnp.float32)],                  # av scratch
        ),
        compiler_params=pltpu.CompilerParams(dimension_semantics=("parallel",)),
    )(x3, xm3, p3, wq_all, wkv_all, wout, u_row, v_row)

    return jnp.transpose(out3, (1, 0, 2))                                # (cur, B, Din)


# ---------------- pure-JAX reference (direct translation of the torch module) --------------

def _rel_shift_ref(x):
    cur, total = x.shape[0], x.shape[1]
    zero_pad = jnp.zeros((cur, 1) + x.shape[2:], x.dtype)
    padded = jnp.concatenate([zero_pad, x], axis=1)
    padded = padded.reshape((total + 1, cur) + x.shape[2:])[1:]
    return padded.reshape(x.shape)


def reference_forward(x, pos_emb, memory, u, v, params, *, n_heads, dim_inner):
    cur, batch, _ = x.shape
    pre = memory.shape[0]
    total = cur + pre
    hd = n_heads * dim_inner
    scale = 1.0 / math.sqrt(dim_inner)

    xm = jnp.concatenate([memory, x], axis=0)
    kv = xm @ params["wkv"]
    k, val = jnp.split(kv, 2, axis=-1)
    q = x @ params["wq"]
    q4 = q.reshape(cur, batch, n_heads, dim_inner)
    k4 = k.reshape(total, batch, n_heads, dim_inner)
    v4 = val.reshape(total, batch, n_heads, dim_inner)
    content = jnp.einsum("ibhd,jbhd->ijbh", q4 + u, k4)
    p3 = (pos_emb @ params["wpos"]).reshape(total, n_heads, dim_inner)
    pos_attn = _rel_shift_ref(jnp.einsum("ibhd,jhd->ijbh", q4 + v, p3))
    attn = jax.nn.softmax((pos_attn + content) * scale, axis=1)
    awv = jnp.einsum("ijbh,jbhd->ibhd", attn, v4).reshape(cur, batch, hd)
    return awv @ params["wout"]


if __name__ == "__main__":
    CUR, PRE, B = 8, 8, 2          # current seq, memory seq, batch
    DIN, D, H = 32, 8, 4           # dim_input, dim_inner, n_heads
    TOTAL = CUR + PRE

    key = jax.random.PRNGKey(0)
    ks = jax.random.split(key, 9)
    x = jax.random.normal(ks[0], (CUR, B, DIN), jnp.float32)
    memory = jax.random.normal(ks[1], (PRE, B, DIN), jnp.float32)
    pos_emb = jax.random.normal(ks[2], (TOTAL, DIN), jnp.float32)
    u = 0.1 * jax.random.normal(ks[3], (H, D), jnp.float32)
    v = 0.1 * jax.random.normal(ks[4], (H, D), jnp.float32)

    # Deterministic synthetic weights, stored in (in_features, out_features) layout
    # (i.e. transposed torch nn.Linear weights); all Linear layers have bias=False.
    def init(k, fan_in, shape):
        return jax.random.normal(k, shape, jnp.float32) / math.sqrt(fan_in)

    params = {
        "wkv": init(ks[5], DIN, (DIN, 2 * H * D)),   # key_value_linear
        "wq": init(ks[6], DIN, (DIN, H * D)),        # query_linear
        "wpos": init(ks[7], DIN, (DIN, H * D)),      # position_attention
        "wout": init(ks[8], H * D, (H * D, DIN)),    # output_layer
    }

    out = multi_head_attention_xl(x, pos_emb, memory, u, v, params,
                                  n_heads=H, dim_inner=D)
    out = jax.block_until_ready(out)

    ref = jax.block_until_ready(
        reference_forward(x, pos_emb, memory, u, v, params, n_heads=H, dim_inner=D))

    assert out.shape == (CUR, B, DIN)
    np.testing.assert_allclose(np.asarray(out), np.asarray(ref), rtol=5e-2, atol=5e-2)
    print("KERNEL_OK")
</pallas_src>

<mosaic_0001>
module attributes {stable_mosaic.version = 11 : i64} {
  func.func @kernel(%arg0: i32, %arg1: memref<1x8x32xbf16, #tpu.memory_space<vmem>>, %arg2: memref<1x16x32xbf16, #tpu.memory_space<vmem>>, %arg3: memref<4x16x8xbf16, #tpu.memory_space<vmem>>, %arg4: memref<32x32xbf16, #tpu.memory_space<vmem>>, %arg5: memref<32x64xbf16, #tpu.memory_space<vmem>>, %arg6: memref<32x32xbf16, #tpu.memory_space<vmem>>, %arg7: memref<1x32xf32, #tpu.memory_space<vmem>>, %arg8: memref<1x32xf32, #tpu.memory_space<vmem>>, %arg9: memref<1x8x32xf32, #tpu.memory_space<vmem>>, %arg10: memref<8x32xf32, #tpu.memory_space<vmem>>) attributes {dimension_semantics = [#tpu.dimension_semantics<parallel>], iteration_bounds = array<i64: 2>, scalar_prefetch = 0 : i64, scratch_operands = 1 : i64, tpu.core_type = #tpu.core_type<tc>, window_params = [{transform_indices = @transform_0, window_bounds = array<i64: 1, 8, 32>}, {transform_indices = @transform_1, window_bounds = array<i64: 1, 16, 32>}, {pipeline_mode = #tpu.pipeline_mode<synchronous>, transform_indices = @transform_2, window_bounds = array<i64: 4, 16, 8>}, {pipeline_mode = #tpu.pipeline_mode<synchronous>, transform_indices = @transform_3, window_bounds = array<i64: 32, 32>}, {pipeline_mode = #tpu.pipeline_mode<synchronous>, transform_indices = @transform_4, window_bounds = array<i64: 32, 64>}, {pipeline_mode = #tpu.pipeline_mode<synchronous>, transform_indices = @transform_5, window_bounds = array<i64: 32, 32>}, {pipeline_mode = #tpu.pipeline_mode<synchronous>, transform_indices = @transform_6, window_bounds = array<i64: 1, 32>}, {pipeline_mode = #tpu.pipeline_mode<synchronous>, transform_indices = @transform_7, window_bounds = array<i64: 1, 32>}, {transform_indices = @transform_8, window_bounds = array<i64: 1, 8, 32>}]} {
    %c0 = arith.constant 0 : index
    %c0_0 = arith.constant 0 : index
    %c0_1 = arith.constant 0 : index
    %0 = vector.load %arg1[%c0, %c0_0, %c0_1] : memref<1x8x32xbf16, #tpu.memory_space<vmem>>, vector<1x8x32xbf16>
    %1 = vector.shape_cast %0 : vector<1x8x32xbf16> to vector<8x32xbf16>
    %c0_2 = arith.constant 0 : index
    %c0_3 = arith.constant 0 : index
    %c0_4 = arith.constant 0 : index
    %2 = vector.load %arg2[%c0_2, %c0_3, %c0_4] : memref<1x16x32xbf16, #tpu.memory_space<vmem>>, vector<1x16x32xbf16>
    %3 = vector.shape_cast %2 : vector<1x16x32xbf16> to vector<16x32xbf16>
    %c0_5 = arith.constant 0 : index
    %c0_6 = arith.constant 0 : index
    %4 = vector.load %arg4[%c0_5, %c0_6] : memref<32x32xbf16, #tpu.memory_space<vmem>>, vector<32x32xbf16>
    %cst = arith.constant dense<0.000000e+00> : vector<8x32xf32>
    %5 = tpu.matmul %1, %4, %cst {dimension_numbers = #tpu.dot_dimension_numbers<[1], [0], [0], [1], [0, 0, 1, 1], [], []>} : vector<8x32xbf16>, vector<32x32xbf16>, vector<8x32xf32> -> vector<8x32xf32>
    %c0_7 = arith.constant 0 : index
    %c0_8 = arith.constant 0 : index
    %6 = vector.load %arg5[%c0_7, %c0_8] : memref<32x64xbf16, #tpu.memory_space<vmem>>, vector<32x64xbf16>
    %cst_9 = arith.constant dense<0.000000e+00> : vector<16x64xf32>
    %7 = tpu.matmul %3, %6, %cst_9 {dimension_numbers = #tpu.dot_dimension_numbers<[1], [0], [0], [1], [0, 0, 1, 1], [], []>} : vector<16x32xbf16>, vector<32x64xbf16>, vector<16x64xf32> -> vector<16x64xf32>
    %8 = arith.truncf %7 : vector<16x64xf32> to vector<16x64xbf16>
    %c0_10 = arith.constant 0 : index
    %c0_11 = arith.constant 0 : index
    %9 = vector.load %arg7[%c0_10, %c0_11] : memref<1x32xf32, #tpu.memory_space<vmem>>, vector<1x32xf32>
    %10 = vector.broadcast %9 : vector<1x32xf32> to vector<8x32xf32>
    %11 = arith.addf %5, %10 : vector<8x32xf32>
    %12 = arith.truncf %11 : vector<8x32xf32> to vector<8x32xbf16>
    %c0_12 = arith.constant 0 : index
    %c0_13 = arith.constant 0 : index
    %13 = vector.load %arg8[%c0_12, %c0_13] : memref<1x32xf32, #tpu.memory_space<vmem>>, vector<1x32xf32>
    %14 = vector.broadcast %13 : vector<1x32xf32> to vector<8x32xf32>
    %15 = arith.addf %5, %14 : vector<8x32xf32>
    %16 = arith.truncf %15 : vector<8x32xf32> to vector<8x32xbf16>
    %17 = vector.extract_strided_slice %16 {offsets = [0, 0], sizes = [8, 8], strides = [1, 1]} : vector<8x32xbf16> to vector<8x8xbf16>
    %c0_14 = arith.constant 0 : index
    %c0_15 = arith.constant 0 : index
    %c0_16 = arith.constant 0 : index
    %18 = vector.load %arg3[%c0_14, %c0_15, %c0_16] : memref<4x16x8xbf16, #tpu.memory_space<vmem>>, vector<1x16x8xbf16>
    %19 = vector.shape_cast %18 : vector<1x16x8xbf16> to vector<16x8xbf16>
    %cst_17 = arith.constant dense<0.000000e+00> : vector<8x16xf32>
    %20 = tpu.matmul %17, %19, %cst_17 {dimension_numbers = #tpu.dot_dimension_numbers<[1], [1], [0], [0], [0, 0, 1, 0], [], []>} : vector<8x8xbf16>, vector<16x8xbf16>, vector<8x16xf32> -> vector<8x16xf32>
    %21 = vector.extract_strided_slice %20 {offsets = [0, 7], sizes = [1, 9], strides = [1, 1]} : vector<8x16xf32> to vector<1x9xf32>
    %cst_18 = arith.constant 0.000000e+00 : f32
    %22 = vector.broadcast %cst_18 : f32 to vector<1x1xf32>
    %23 = vector.extract_strided_slice %20 {offsets = [1, 0], sizes = [1, 6], strides = [1, 1]} : vector<8x16xf32> to vector<1x6xf32>
    %24 = tpu.concatenate %21, %22, %23 in 1 : vector<1x9xf32>, vector<1x1xf32>, vector<1x6xf32> -> vector<1x16xf32>
    %25 = vector.extract_strided_slice %20 {offsets = [1, 6], sizes = [1, 10], strides = [1, 1]} : vector<8x16xf32> to vector<1x10xf32>
    %cst_19 = arith.constant 0.000000e+00 : f32
    %26 = vector.broadcast %cst_19 : f32 to vector<1x1xf32>
    %27 = vector.extract_strided_slice %20 {offsets = [2, 0], sizes = [1, 5], strides = [1, 1]} : vector<8x16xf32> to vector<1x5xf32>
    %28 = tpu.concatenate %25, %26, %27 in 1 : vector<1x10xf32>, vector<1x1xf32>, vector<1x5xf32> -> vector<1x16xf32>
    %29 = vector.extract_strided_slice %20 {offsets = [2, 5], sizes = [1, 11], strides = [1, 1]} : vector<8x16xf32> to vector<1x11xf32>
    %cst_20 = arith.constant 0.000000e+00 : f32
    %30 = vector.broadcast %cst_20 : f32 to vector<1x1xf32>
    %31 = vector.extract_strided_slice %20 {offsets = [3, 0], sizes = [1, 4], strides = [1, 1]} : vector<8x16xf32> to vector<1x4xf32>
    %32 = tpu.concatenate %29, %30, %31 in 1 : vector<1x11xf32>, vector<1x1xf32>, vector<1x4xf32> -> vector<1x16xf32>
    %33 = vector.extract_strided_slice %20 {offsets = [3, 4], sizes = [1, 12], strides = [1, 1]} : vector<8x16xf32> to vector<1x12xf32>
    %cst_21 = arith.constant 0.000000e+00 : f32
    %34 = vector.broadcast %cst_21 : f32 to vector<1x1xf32>
    %35 = vector.extract_strided_slice %20 {offsets = [4, 0], sizes = [1, 3], strides = [1, 1]} : vector<8x16xf32> to vector<1x3xf32>
    %36 = tpu.concatenate %33, %34, %35 in 1 : vector<1x12xf32>, vector<1x1xf32>, vector<1x3xf32> -> vector<1x16xf32>
    %37 = vector.extract_strided_slice %20 {offsets = [4, 3], sizes = [1, 13], strides = [1, 1]} : vector<8x16xf32> to vector<1x13xf32>
    %cst_22 = arith.constant 0.000000e+00 : f32
    %38 = vector.broadcast %cst_22 : f32 to vector<1x1xf32>
    %39 = vector.extract_strided_slice %20 {offsets = [5, 0], sizes = [1, 2], strides = [1, 1]} : vector<8x16xf32> to vector<1x2xf32>
    %40 = tpu.concatenate %37, %38, %39 in 1 : vector<1x13xf32>, vector<1x1xf32>, vector<1x2xf32> -> vector<1x16xf32>
    %41 = vector.extract_strided_slice %20 {offsets = [5, 2], sizes = [1, 14], strides = [1, 1]} : vector<8x16xf32> to vector<1x14xf32>
    %cst_23 = arith.constant 0.000000e+00 : f32
    %42 = vector.broadcast %cst_23 : f32 to vector<1x1xf32>
    %43 = vector.extract_strided_slice %20 {offsets = [6, 0], sizes = [1, 1], strides = [1, 1]} : vector<8x16xf32> to vector<1x1xf32>
    %44 = tpu.concatenate %41, %42, %43 in 1 : vector<1x14xf32>, vector<1x1xf32>, vector<1x1xf32> -> vector<1x16xf32>
    %45 = vector.extract_strided_slice %20 {offsets = [6, 1], sizes = [1, 15], strides = [1, 1]} : vector<8x16xf32> to vector<1x15xf32>
    %cst_24 = arith.constant 0.000000e+00 : f32
    %46 = vector.broadcast %cst_24 : f32 to vector<1x1xf32>
    %47 = tpu.concatenate %45, %46 in 1 : vector<1x15xf32>, vector<1x1xf32> -> vector<1x16xf32>
    %48 = vector.extract_strided_slice %20 {offsets = [7, 0], sizes = [1, 16], strides = [1, 1]} : vector<8x16xf32> to vector<1x16xf32>
    %49 = tpu.concatenate %24, %28, %32, %36, %40, %44, %47, %48 in 0 : vector<1x16xf32>, vector<1x16xf32>, vector<1x16xf32>, vector<1x16xf32>, vector<1x16xf32>, vector<1x16xf32>, vector<1x16xf32>, vector<1x16xf32> -> vector<8x16xf32>
    %50 = vector.extract_strided_slice %12 {offsets = [0, 0], sizes = [8, 8], strides = [1, 1]} : vector<8x32xbf16> to vector<8x8xbf16>
    %51 = vector.extract_strided_slice %8 {offsets = [0, 0], sizes = [16, 8], strides = [1, 1]} : vector<16x64xbf16> to vector<16x8xbf16>
    %cst_25 = arith.constant dense<0.000000e+00> : vector<8x16xf32>
    %52 = tpu.matmul %50, %51, %cst_25 {dimension_numbers = #tpu.dot_dimension_numbers<[1], [1], [0], [0], [0, 0, 1, 0], [], []>} : vector<8x8xbf16>, vector<16x8xbf16>, vector<8x16xf32> -> vector<8x16xf32>
    %53 = arith.addf %52, %49 : vector<8x16xf32>
    %cst_26 = arith.constant dense<0xFF800000> : vector<8xf32>
    %54 = vector.multi_reduction <maximumf>, %53, %cst_26 [1] : vector<8x16xf32> to vector<8xf32>
    %55 = vector.shape_cast %54 : vector<8xf32> to vector<8x1xf32>
    %56 = vector.broadcast %55 : vector<8x1xf32> to vector<8x16xf32>
    %57 = arith.subf %53, %56 : vector<8x16xf32>
    %58 = math.exp %57 : vector<8x16xf32>
    %cst_27 = arith.constant dense<0.000000e+00> : vector<8xf32>
    %59 = vector.multi_reduction <add>, %58, %cst_27 [1] : vector<8x16xf32> to vector<8xf32>
    %60 = vector.shape_cast %59 : vector<8xf32> to vector<8x1xf32>
    %61 = tpu.reciprocal %60 {approx = true} : vector<8x1xf32> -> vector<8x1xf32>
    %62 = vector.broadcast %61 : vector<8x1xf32> to vector<8x16xf32>
    %63 = arith.mulf %58, %62 : vector<8x16xf32>
    %64 = arith.truncf %63 : vector<8x16xf32> to vector<8x16xbf16>
    %65 = vector.extract_strided_slice %8 {offsets = [0, 32], sizes = [16, 8], strides = [1, 1]} : vector<16x64xbf16> to vector<16x8xbf16>
    %cst_28 = arith.constant dense<0.000000e+00> : vector<8x8xf32>
    %66 = tpu.matmul %64, %65, %cst_28 {dimension_numbers = #tpu.dot_dimension_numbers<[1], [0], [0], [1], [0, 0, 1, 1], [], []>} : vector<8x16xbf16>, vector<16x8xbf16>, vector<8x8xf32> -> vector<8x8xf32>
    %c0_29 = arith.constant 0 : index
    %c0_30 = arith.constant 0 : index
    %67 = vector.load %arg10[%c0_29, %c0_30] : memref<8x32xf32, #tpu.memory_space<vmem>>, vector<8x8xf32>
    tpu.vector_store %arg10[%c0_29, %c0_30], %66 {strides = array<i32>} : memref<8x32xf32, #tpu.memory_space<vmem>>, vector<8x8xf32>,
    %68 = vector.extract_strided_slice %16 {offsets = [0, 8], sizes = [8, 8], strides = [1, 1]} : vector<8x32xbf16> to vector<8x8xbf16>
    %c1 = arith.constant 1 : index
    %c0_31 = arith.constant 0 : index
    %c0_32 = arith.constant 0 : index
    %69 = vector.load %arg3[%c1, %c0_31, %c0_32] : memref<4x16x8xbf16, #tpu.memory_space<vmem>>, vector<1x16x8xbf16>
    %70 = vector.shape_cast %69 : vector<1x16x8xbf16> to vector<16x8xbf16>
    %cst_33 = arith.constant dense<0.000000e+00> : vector<8x16xf32>
    %71 = tpu.matmul %68, %70, %cst_33 {dimension_numbers = #tpu.dot_dimension_numbers<[1], [1], [0], [0], [0, 0, 1, 0], [], []>} : vector<8x8xbf16>, vector<16x8xbf16>, vector<8x16xf32> -> vector<8x16xf32>
    %72 = vector.extract_strided_slice %71 {offsets = [0, 7], sizes = [1, 9], strides = [1, 1]} : vector<8x16xf32> to vector<1x9xf32>
    %cst_34 = arith.constant 0.000000e+00 : f32
    %73 = vector.broadcast %cst_34 : f32 to vector<1x1xf32>
    %74 = vector.extract_strided_slice %71 {offsets = [1, 0], sizes = [1, 6], strides = [1, 1]} : vector<8x16xf32> to vector<1x6xf32>
    %75 = tpu.concatenate %72, %73, %74 in 1 : vector<1x9xf32>, vector<1x1xf32>, vector<1x6xf32> -> vector<1x16xf32>
    %76 = vector.extract_strided_slice %71 {offsets = [1, 6], sizes = [1, 10], strides = [1, 1]} : vector<8x16xf32> to vector<1x10xf32>
    %cst_35 = arith.constant 0.000000e+00 : f32
    %77 = vector.broadcast %cst_35 : f32 to vector<1x1xf32>
    %78 = vector.extract_strided_slice %71 {offsets = [2, 0], sizes = [1, 5], strides = [1, 1]} : vector<8x16xf32> to vector<1x5xf32>
    %79 = tpu.concatenate %76, %77, %78 in 1 : vector<1x10xf32>, vector<1x1xf32>, vector<1x5xf32> -> vector<1x16xf32>
    %80 = vector.extract_strided_slice %71 {offsets = [2, 5], sizes = [1, 11], strides = [1, 1]} : vector<8x16xf32> to vector<1x11xf32>
    %cst_36 = arith.constant 0.000000e+00 : f32
    %81 = vector.broadcast %cst_36 : f32 to vector<1x1xf32>
    %82 = vector.extract_strided_slice %71 {offsets = [3, 0], sizes = [1, 4], strides = [1, 1]} : vector<8x16xf32> to vector<1x4xf32>
    %83 = tpu.concatenate %80, %81, %82 in 1 : vector<1x11xf32>, vector<1x1xf32>, vector<1x4xf32> -> vector<1x16xf32>
    %84 = vector.extract_strided_slice %71 {offsets = [3, 4], sizes = [1, 12], strides = [1, 1]} : vector<8x16xf32> to vector<1x12xf32>
    %cst_37 = arith.constant 0.000000e+00 : f32
    %85 = vector.broadcast %cst_37 : f32 to vector<1x1xf32>
    %86 = vector.extract_strided_slice %71 {offsets = [4, 0], sizes = [1, 3], strides = [1, 1]} : vector<8x16xf32> to vector<1x3xf32>
    %87 = tpu.concatenate %84, %85, %86 in 1 : vector<1x12xf32>, vector<1x1xf32>, vector<1x3xf32> -> vector<1x16xf32>
    %88 = vector.extract_strided_slice %71 {offsets = [4, 3], sizes = [1, 13], strides = [1, 1]} : vector<8x16xf32> to vector<1x13xf32>
    %cst_38 = arith.constant 0.000000e+00 : f32
    %89 = vector.broadcast %cst_38 : f32 to vector<1x1xf32>
    %90 = vector.extract_strided_slice %71 {offsets = [5, 0], sizes = [1, 2], strides = [1, 1]} : vector<8x16xf32> to vector<1x2xf32>
    %91 = tpu.concatenate %88, %89, %90 in 1 : vector<1x13xf32>, vector<1x1xf32>, vector<1x2xf32> -> vector<1x16xf32>
    %92 = vector.extract_strided_slice %71 {offsets = [5, 2], sizes = [1, 14], strides = [1, 1]} : vector<8x16xf32> to vector<1x14xf32>
    %cst_39 = arith.constant 0.000000e+00 : f32
    %93 = vector.broadcast %cst_39 : f32 to vector<1x1xf32>
    %94 = vector.extract_strided_slice %71 {offsets = [6, 0], sizes = [1, 1], strides = [1, 1]} : vector<8x16xf32> to vector<1x1xf32>
    %95 = tpu.concatenate %92, %93, %94 in 1 : vector<1x14xf32>, vector<1x1xf32>, vector<1x1xf32> -> vector<1x16xf32>
    %96 = vector.extract_strided_slice %71 {offsets = [6, 1], sizes = [1, 15], strides = [1, 1]} : vector<8x16xf32> to vector<1x15xf32>
    %cst_40 = arith.constant 0.000000e+00 : f32
    %97 = vector.broadcast %cst_40 : f32 to vector<1x1xf32>
    %98 = tpu.concatenate %96, %97 in 1 : vector<1x15xf32>, vector<1x1xf32> -> vector<1x16xf32>
    %99 = vector.extract_strided_slice %71 {offsets = [7, 0], sizes = [1, 16], strides = [1, 1]} : vector<8x16xf32> to vector<1x16xf32>
    %100 = tpu.concatenate %75, %79, %83, %87, %91, %95, %98, %99 in 0 : vector<1x16xf32>, vector<1x16xf32>, vector<1x16xf32>, vector<1x16xf32>, vector<1x16xf32>, vector<1x16xf32>, vector<1x16xf32>, vector<1x16xf32> -> vector<8x16xf32>
    %101 = vector.extract_strided_slice %12 {offsets = [0, 8], sizes = [8, 8], strides = [1, 1]} : vector<8x32xbf16> to vector<8x8xbf16>
    %102 = vector.extract_strided_slice %8 {offsets = [0, 8], sizes = [16, 8], strides = [1, 1]} : vector<16x64xbf16> to vector<16x8xbf16>
    %cst_41 = arith.constant dense<0.000000e+00> : vector<8x16xf32>
    %103 = tpu.matmul %101, %102, %cst_41 {dimension_numbers = #tpu.dot_dimension_numbers<[1], [1], [0], [0], [0, 0, 1, 0], [], []>} : vector<8x8xbf16>, vector<16x8xbf16>, vector<8x16xf32> -> vector<8x16xf32>
    %104 = arith.addf %103, %100 : vector<8x16xf32>
    %cst_42 = arith.constant dense<0xFF800000> : vector<8xf32>
    %105 = vector.multi_reduction <maximumf>, %104, %cst_42 [1] : vector<8x16xf32> to vector<8xf32>
    %106 = vector.shape_cast %105 : vector<8xf32> to vector<8x1xf32>
    %107 = vector.broadcast %106 : vector<8x1xf32> to vector<8x16xf32>
    %108 = arith.subf %104, %107 : vector<8x16xf32>
    %109 = math.exp %108 : vector<8x16xf32>
    %cst_43 = arith.constant dense<0.000000e+00> : vector<8xf32>
    %110 = vector.multi_reduction <add>, %109, %cst_43 [1] : vector<8x16xf32> to vector<8xf32>
    %111 = vector.shape_cast %110 : vector<8xf32> to vector<8x1xf32>
    %112 = tpu.reciprocal %111 {approx = true} : vector<8x1xf32> -> vector<8x1xf32>
    %113 = vector.broadcast %112 : vector<8x1xf32> to vector<8x16xf32>
    %114 = arith.mulf %109, %113 : vector<8x16xf32>
    %115 = arith.truncf %114 : vector<8x16xf32> to vector<8x16xbf16>
    %116 = vector.extract_strided_slice %8 {offsets = [0, 40], sizes = [16, 8], strides = [1, 1]} : vector<16x64xbf16> to vector<16x8xbf16>
    %cst_44 = arith.constant dense<0.000000e+00> : vector<8x8xf32>
    %117 = tpu.matmul %115, %116, %cst_44 {dimension_numbers = #tpu.dot_dimension_numbers<[1], [0], [0], [1], [0, 0, 1, 1], [], []>} : vector<8x16xbf16>, vector<16x8xbf16>, vector<8x8xf32> -> vector<8x8xf32>
    %c0_45 = arith.constant 0 : index
    %c8 = arith.constant 8 : index
    %118 = vector.load %arg10[%c0_45, %c8] : memref<8x32xf32, #tpu.memory_space<vmem>>, vector<8x8xf32>
    tpu.vector_store %arg10[%c0_45, %c8], %117 {strides = array<i32>} : memref<8x32xf32, #tpu.memory_space<vmem>>, vector<8x8xf32>,
    %119 = vector.extract_strided_slice %16 {offsets = [0, 16], sizes = [8, 8], strides = [1, 1]} : vector<8x32xbf16> to vector<8x8xbf16>
    %c2 = arith.constant 2 : index
    %c0_46 = arith.constant 0 : index
    %c0_47 = arith.constant 0 : index
    %120 = vector.load %arg3[%c2, %c0_46, %c0_47] : memref<4x16x8xbf16, #tpu.memory_space<vmem>>, vector<1x16x8xbf16>
    %121 = vector.shape_cast %120 : vector<1x16x8xbf16> to vector<16x8xbf16>
    %cst_48 = arith.constant dense<0.000000e+00> : vector<8x16xf32>
    %122 = tpu.matmul %119, %121, %cst_48 {dimension_numbers = #tpu.dot_dimension_numbers<[1], [1], [0], [0], [0, 0, 1, 0], [], []>} : vector<8x8xbf16>, vector<16x8xbf16>, vector<8x16xf32> -> vector<8x16xf32>
    %123 = vector.extract_strided_slice %122 {offsets = [0, 7], sizes = [1, 9], strides = [1, 1]} : vector<8x16xf32> to vector<1x9xf32>
    %cst_49 = arith.constant 0.000000e+00 : f32
    %124 = vector.broadcast %cst_49 : f32 to vector<1x1xf32>
    %125 = vector.extract_strided_slice %122 {offsets = [1, 0], sizes = [1, 6], strides = [1, 1]} : vector<8x16xf32> to vector<1x6xf32>
    %126 = tpu.concatenate %123, %124, %125 in 1 : vector<1x9xf32>, vector<1x1xf32>, vector<1x6xf32> -> vector<1x16xf32>
    %127 = vector.extract_strided_slice %122 {offsets = [1, 6], sizes = [1, 10], strides = [1, 1]} : vector<8x16xf32> to vector<1x10xf32>
    %cst_50 = arith.constant 0.000000e+00 : f32
    %128 = vector.broadcast %cst_50 : f32 to vector<1x1xf32>
    %129 = vector.extract_strided_slice %122 {offsets = [2, 0], sizes = [1, 5], strides = [1, 1]} : vector<8x16xf32> to vector<1x5xf32>
    %130 = tpu.concatenate %127, %128, %129 in 1 : vector<1x10xf32>, vector<1x1xf32>, vector<1x5xf32> -> vector<1x16xf32>
    %131 = vector.extract_strided_slice %122 {offsets = [2, 5], sizes = [1, 11], strides = [1, 1]} : vector<8x16xf32> to vector<1x11xf32>
    %cst_51 = arith.constant 0.000000e+00 : f32
    %132 = vector.broadcast %cst_51 : f32 to vector<1x1xf32>
    %133 = vector.extract_strided_slice %122 {offsets = [3, 0], sizes = [1, 4], strides = [1, 1]} : vector<8x16xf32> to vector<1x4xf32>
    %134 = tpu.concatenate %131, %132, %133 in 1 : vector<1x11xf32>, vector<1x1xf32>, vector<1x4xf32> -> vector<1x16xf32>
    %135 = vector.extract_strided_slice %122 {offsets = [3, 4], sizes = [1, 12], strides = [1, 1]} : vector<8x16xf32> to vector<1x12xf32>
    %cst_52 = arith.constant 0.000000e+00 : f32
    %136 = vector.broadcast %cst_52 : f32 to vector<1x1xf32>
    %137 = vector.extract_strided_slice %122 {offsets = [4, 0], sizes = [1, 3], strides = [1, 1]} : vector<8x16xf32> to vector<1x3xf32>
    %138 = tpu.concatenate %135, %136, %137 in 1 : vector<1x12xf32>, vector<1x1xf32>, vector<1x3xf32> -> vector<1x16xf32>
    %139 = vector.extract_strided_slice %122 {offsets = [4, 3], sizes = [1, 13], strides = [1, 1]} : vector<8x16xf32> to vector<1x13xf32>
    %cst_53 = arith.constant 0.000000e+00 : f32
    %140 = vector.broadcast %cst_53 : f32 to vector<1x1xf32>
    %141 = vector.extract_strided_slice %122 {offsets = [5, 0], sizes = [1, 2], strides = [1, 1]} : vector<8x16xf32> to vector<1x2xf32>
    %142 = tpu.concatenate %139, %140, %141 in 1 : vector<1x13xf32>, vector<1x1xf32>, vector<1x2xf32> -> vector<1x16xf32>
    %143 = vector.extract_strided_slice %122 {offsets = [5, 2], sizes = [1, 14], strides = [1, 1]} : vector<8x16xf32> to vector<1x14xf32>
    %cst_54 = arith.constant 0.000000e+00 : f32
    %144 = vector.broadcast %cst_54 : f32 to vector<1x1xf32>
    %145 = vector.extract_strided_slice %122 {offsets = [6, 0], sizes = [1, 1], strides = [1, 1]} : vector<8x16xf32> to vector<1x1xf32>
    %146 = tpu.concatenate %143, %144, %145 in 1 : vector<1x14xf32>, vector<1x1xf32>, vector<1x1xf32> -> vector<1x16xf32>
    %147 = vector.extract_strided_slice %122 {offsets = [6, 1], sizes = [1, 15], strides = [1, 1]} : vector<8x16xf32> to vector<1x15xf32>
    %cst_55 = arith.constant 0.000000e+00 : f32
    %148 = vector.broadcast %cst_55 : f32 to vector<1x1xf32>
    %149 = tpu.concatenate %147, %148 in 1 : vector<1x15xf32>, vector<1x1xf32> -> vector<1x16xf32>
    %150 = vector.extract_strided_slice %122 {offsets = [7, 0], sizes = [1, 16], strides = [1, 1]} : vector<8x16xf32> to vector<1x16xf32>
    %151 = tpu.concatenate %126, %130, %134, %138, %142, %146, %149, %150 in 0 : vector<1x16xf32>, vector<1x16xf32>, vector<1x16xf32>, vector<1x16xf32>, vector<1x16xf32>, vector<1x16xf32>, vector<1x16xf32>, vector<1x16xf32> -> vector<8x16xf32>
    %152 = vector.extract_strided_slice %12 {offsets = [0, 16], sizes = [8, 8], strides = [1, 1]} : vector<8x32xbf16> to vector<8x8xbf16>
    %153 = vector.extract_strided_slice %8 {offsets = [0, 16], sizes = [16, 8], strides = [1, 1]} : vector<16x64xbf16> to vector<16x8xbf16>
    %cst_56 = arith.constant dense<0.000000e+00> : vector<8x16xf32>
    %154 = tpu.matmul %152, %153, %cst_56 {dimension_numbers = #tpu.dot_dimension_numbers<[1], [1], [0], [0], [0, 0, 1, 0], [], []>} : vector<8x8xbf16>, vector<16x8xbf16>, vector<8x16xf32> -> vector<8x16xf32>
    %155 = arith.addf %154, %151 : vector<8x16xf32>
    %cst_57 = arith.constant dense<0xFF800000> : vector<8xf32>
    %156 = vector.multi_reduction <maximumf>, %155, %cst_57 [1] : vector<8x16xf32> to vector<8xf32>
    %157 = vector.shape_cast %156 : vector<8xf32> to vector<8x1xf32>
    %158 = vector.broadcast %157 : vector<8x1xf32> to vector<8x16xf32>
    %159 = arith.subf %155, %158 : vector<8x16xf32>
    %160 = math.exp %159 : vector<8x16xf32>
    %cst_58 = arith.constant dense<0.000000e+00> : vector<8xf32>
    %161 = vector.multi_reduction <add>, %160, %cst_58 [1] : vector<8x16xf32> to vector<8xf32>
    %162 = vector.shape_cast %161 : vector<8xf32> to vector<8x1xf32>
    %163 = tpu.reciprocal %162 {approx = true} : vector<8x1xf32> -> vector<8x1xf32>
    %164 = vector.broadcast %163 : vector<8x1xf32> to vector<8x16xf32>
    %165 = arith.mulf %160, %164 : vector<8x16xf32>
    %166 = arith.truncf %165 : vector<8x16xf32> to vector<8x16xbf16>
    %167 = vector.extract_strided_slice %8 {offsets = [0, 48], sizes = [16, 8], strides = [1, 1]} : vector<16x64xbf16> to vector<16x8xbf16>
    %cst_59 = arith.constant dense<0.000000e+00> : vector<8x8xf32>
    %168 = tpu.matmul %166, %167, %cst_59 {dimension_numbers = #tpu.dot_dimension_numbers<[1], [0], [0], [1], [0, 0, 1, 1], [], []>} : vector<8x16xbf16>, vector<16x8xbf16>, vector<8x8xf32> -> vector<8x8xf32>
    %c0_60 = arith.constant 0 : index
    %c16 = arith.constant 16 : index
    %169 = vector.load %arg10[%c0_60, %c16] : memref<8x32xf32, #tpu.memory_space<vmem>>, vector<8x8xf32>
    tpu.vector_store %arg10[%c0_60, %c16], %168 {strides = array<i32>} : memref<8x32xf32, #tpu.memory_space<vmem>>, vector<8x8xf32>,
    %170 = vector.extract_strided_slice %16 {offsets = [0, 24], sizes = [8, 8], strides = [1, 1]} : vector<8x32xbf16> to vector<8x8xbf16>
    %c3 = arith.constant 3 : index
    %c0_61 = arith.constant 0 : index
    %c0_62 = arith.constant 0 : index
    %171 = vector.load %arg3[%c3, %c0_61, %c0_62] : memref<4x16x8xbf16, #tpu.memory_space<vmem>>, vector<1x16x8xbf16>
    %172 = vector.shape_cast %171 : vector<1x16x8xbf16> to vector<16x8xbf16>
    %cst_63 = arith.constant dense<0.000000e+00> : vector<8x16xf32>
    %173 = tpu.matmul %170, %172, %cst_63 {dimension_numbers = #tpu.dot_dimension_numbers<[1], [1], [0], [0], [0, 0, 1, 0], [], []>} : vector<8x8xbf16>, vector<16x8xbf16>, vector<8x16xf32> -> vector<8x16xf32>
    %174 = vector.extract_strided_slice %173 {offsets = [0, 7], sizes = [1, 9], strides = [1, 1]} : vector<8x16xf32> to vector<1x9xf32>
    %cst_64 = arith.constant 0.000000e+00 : f32
    %175 = vector.broadcast %cst_64 : f32 to vector<1x1xf32>
    %176 = vector.extract_strided_slice %173 {offsets = [1, 0], sizes = [1, 6], strides = [1, 1]} : vector<8x16xf32> to vector<1x6xf32>
    %177 = tpu.concatenate %174, %175, %176 in 1 : vector<1x9xf32>, vector<1x1xf32>, vector<1x6xf32> -> vector<1x16xf32>
    %178 = vector.extract_strided_slice %173 {offsets = [1, 6], sizes = [1, 10], strides = [1, 1]} : vector<8x16xf32> to vector<1x10xf32>
    %cst_65 = arith.constant 0.000000e+00 : f32
    %179 = vector.broadcast %cst_65 : f32 to vector<1x1xf32>
    %180 = vector.extract_strided_slice %173 {offsets = [2, 0], sizes = [1, 5], strides = [1, 1]} : vector<8x16xf32> to vector<1x5xf32>
    %181 = tpu.concatenate %178, %179, %180 in 1 : vector<1x10xf32>, vector<1x1xf32>, vector<1x5xf32> -> vector<1x16xf32>
    %182 = vector.extract_strided_slice %173 {offsets = [2, 5], sizes = [1, 11], strides = [1, 1]} : vector<8x16xf32> to vector<1x11xf32>
    %cst_66 = arith.constant 0.000000e+00 : f32
    %183 = vector.broadcast %cst_66 : f32 to vector<1x1xf32>
    %184 = vector.extract_strided_slice %173 {offsets = [3, 0], sizes = [1, 4], strides = [1, 1]} : vector<8x16xf32> to vector<1x4xf32>
    %185 = tpu.concatenate %182, %183, %184 in 1 : vector<1x11xf32>, vector<1x1xf32>, vector<1x4xf32> -> vector<1x16xf32>
    %186 = vector.extract_strided_slice %173 {offsets = [3, 4], sizes = [1, 12], strides = [1, 1]} : vector<8x16xf32> to vector<1x12xf32>
    %cst_67 = arith.constant 0.000000e+00 : f32
    %187 = vector.broadcast %cst_67 : f32 to vector<1x1xf32>
    %188 = vector.extract_strided_slice %173 {offsets = [4, 0], sizes = [1, 3], strides = [1, 1]} : vector<8x16xf32> to vector<1x3xf32>
    %189 = tpu.concatenate %186, %187, %188 in 1 : vector<1x12xf32>, vector<1x1xf32>, vector<1x3xf32> -> vector<1x16xf32>
    %190 = vector.extract_strided_slice %173 {offsets = [4, 3], sizes = [1, 13], strides = [1, 1]} : vector<8x16xf32> to vector<1x13xf32>
    %cst_68 = arith.constant 0.000000e+00 : f32
    %191 = vector.broadcast %cst_68 : f32 to vector<1x1xf32>
    %192 = vector.extract_strided_slice %173 {offsets = [5, 0], sizes = [1, 2], strides = [1, 1]} : vector<8x16xf32> to vector<1x2xf32>
    %193 = tpu.concatenate %190, %191, %192 in 1 : vector<1x13xf32>, vector<1x1xf32>, vector<1x2xf32> -> vector<1x16xf32>
    %194 = vector.extract_strided_slice %173 {offsets = [5, 2], sizes = [1, 14], strides = [1, 1]} : vector<8x16xf32> to vector<1x14xf32>
    %cst_69 = arith.constant 0.000000e+00 : f32
    %195 = vector.broadcast %cst_69 : f32 to vector<1x1xf32>
    %196 = vector.extract_strided_slice %173 {offsets = [6, 0], sizes = [1, 1], strides = [1, 1]} : vector<8x16xf32> to vector<1x1xf32>
    %197 = tpu.concatenate %194, %195, %196 in 1 : vector<1x14xf32>, vector<1x1xf32>, vector<1x1xf32> -> vector<1x16xf32>
    %198 = vector.extract_strided_slice %173 {offsets = [6, 1], sizes = [1, 15], strides = [1, 1]} : vector<8x16xf32> to vector<1x15xf32>
    %cst_70 = arith.constant 0.000000e+00 : f32
    %199 = vector.broadcast %cst_70 : f32 to vector<1x1xf32>
    %200 = tpu.concatenate %198, %199 in 1 : vector<1x15xf32>, vector<1x1xf32> -> vector<1x16xf32>
    %201 = vector.extract_strided_slice %173 {offsets = [7, 0], sizes = [1, 16], strides = [1, 1]} : vector<8x16xf32> to vector<1x16xf32>
    %202 = tpu.concatenate %177, %181, %185, %189, %193, %197, %200, %201 in 0 : vector<1x16xf32>, vector<1x16xf32>, vector<1x16xf32>, vector<1x16xf32>, vector<1x16xf32>, vector<1x16xf32>, vector<1x16xf32>, vector<1x16xf32> -> vector<8x16xf32>
    %203 = vector.extract_strided_slice %12 {offsets = [0, 24], sizes = [8, 8], strides = [1, 1]} : vector<8x32xbf16> to vector<8x8xbf16>
    %204 = vector.extract_strided_slice %8 {offsets = [0, 24], sizes = [16, 8], strides = [1, 1]} : vector<16x64xbf16> to vector<16x8xbf16>
    %cst_71 = arith.constant dense<0.000000e+00> : vector<8x16xf32>
    %205 = tpu.matmul %203, %204, %cst_71 {dimension_numbers = #tpu.dot_dimension_numbers<[1], [1], [0], [0], [0, 0, 1, 0], [], []>} : vector<8x8xbf16>, vector<16x8xbf16>, vector<8x16xf32> -> vector<8x16xf32>
    %206 = arith.addf %205, %202 : vector<8x16xf32>
    %cst_72 = arith.constant dense<0xFF800000> : vector<8xf32>
    %207 = vector.multi_reduction <maximumf>, %206, %cst_72 [1] : vector<8x16xf32> to vector<8xf32>
    %208 = vector.shape_cast %207 : vector<8xf32> to vector<8x1xf32>
    %209 = vector.broadcast %208 : vector<8x1xf32> to vector<8x16xf32>
    %210 = arith.subf %206, %209 : vector<8x16xf32>
    %211 = math.exp %210 : vector<8x16xf32>
    %cst_73 = arith.constant dense<0.000000e+00> : vector<8xf32>
    %212 = vector.multi_reduction <add>, %211, %cst_73 [1] : vector<8x16xf32> to vector<8xf32>
    %213 = vector.shape_cast %212 : vector<8xf32> to vector<8x1xf32>
    %214 = tpu.reciprocal %213 {approx = true} : vector<8x1xf32> -> vector<8x1xf32>
    %215 = vector.broadcast %214 : vector<8x1xf32> to vector<8x16xf32>
    %216 = arith.mulf %211, %215 : vector<8x16xf32>
    %217 = arith.truncf %216 : vector<8x16xf32> to vector<8x16xbf16>
    %218 = vector.extract_strided_slice %8 {offsets = [0, 56], sizes = [16, 8], strides = [1, 1]} : vector<16x64xbf16> to vector<16x8xbf16>
    %cst_74 = arith.constant dense<0.000000e+00> : vector<8x8xf32>
    %219 = tpu.matmul %217, %218, %cst_74 {dimension_numbers = #tpu.dot_dimension_numbers<[1], [0], [0], [1], [0, 0, 1, 1], [], []>} : vector<8x16xbf16>, vector<16x8xbf16>, vector<8x8xf32> -> vector<8x8xf32>
    %c0_75 = arith.constant 0 : index
    %c24 = arith.constant 24 : index
    %220 = vector.load %arg10[%c0_75, %c24] : memref<8x32xf32, #tpu.memory_space<vmem>>, vector<8x8xf32>
    tpu.vector_store %arg10[%c0_75, %c24], %219 {strides = array<i32>} : memref<8x32xf32, #tpu.memory_space<vmem>>, vector<8x8xf32>,
    %c0_76 = arith.constant 0 : index
    %c0_77 = arith.constant 0 : index
    %221 = vector.load %arg10[%c0_76, %c0_77] : memref<8x32xf32, #tpu.memory_space<vmem>>, vector<8x32xf32>
    %222 = arith.truncf %221 : vector<8x32xf32> to vector<8x32xbf16>
    %c0_78 = arith.constant 0 : index
    %c0_79 = arith.constant 0 : index
    %223 = vector.load %arg6[%c0_78, %c0_79] : memref<32x32xbf16, #tpu.memory_space<vmem>>, vector<32x32xbf16>
    %cst_80 = arith.constant dense<0.000000e+00> : vector<8x32xf32>
    %224 = tpu.matmul %222, %223, %cst_80 {dimension_numbers = #tpu.dot_dimension_numbers<[1], [0], [0], [1], [0, 0, 1, 1], [], []>} : vector<8x32xbf16>, vector<32x32xbf16>, vector<8x32xf32> -> vector<8x32xf32>
    %225 = vector.shape_cast %224 : vector<8x32xf32> to vector<1x8x32xf32>
    %c0_81 = arith.constant 0 : index
    %c0_82 = arith.constant 0 : index
    %c0_83 = arith.constant 0 : index
    %226 = vector.load %arg9[%c0_81, %c0_82, %c0_83] : memref<1x8x32xf32, #tpu.memory_space<vmem>>, vector<1x8x32xf32>
    tpu.vector_store %arg9[%c0_81, %c0_82, %c0_83], %225 {strides = array<i32>} : memref<1x8x32xf32, #tpu.memory_space<vmem>>, vector<1x8x32xf32>,
    return
  }
  func.func @transform_0(%arg0: i32) -> (i32, i32, i32) {
    %c0_i32 = arith.constant 0 : i32
    %c0_i32_0 = arith.constant 0 : i32
    %c0_i32_1 = arith.constant 0 : i32
    return %arg0, %c0_i32, %c0_i32_0 : i32, i32, i32
  }
  func.func @transform_1(%arg0: i32) -> (i32, i32, i32) {
    %c0_i32 = arith.constant 0 : i32
    %c0_i32_0 = arith.constant 0 : i32
    %c0_i32_1 = arith.constant 0 : i32
    return %arg0, %c0_i32, %c0_i32_0 : i32, i32, i32
  }
  func.func @transform_2(%arg0: i32) -> (i32, i32, i32) {
    %c0_i32 = arith.constant 0 : i32
    %c0_i32_0 = arith.constant 0 : i32
    %c0_i32_1 = arith.constant 0 : i32
    %c0_i32_2 = arith.constant 0 : i32
    return %c0_i32, %c0_i32_0, %c0_i32_1 : i32, i32, i32
  }
  func.func @transform_3(%arg0: i32) -> (i32, i32) {
    %c0_i32 = arith.constant 0 : i32
    %c0_i32_0 = arith.constant 0 : i32
    %c0_i32_1 = arith.constant 0 : i32
    return %c0_i32, %c0_i32_0 : i32, i32
  }
  func.func @transform_4(%arg0: i32) -> (i32, i32) {
    %c0_i32 = arith.constant 0 : i32
    %c0_i32_0 = arith.constant 0 : i32
    %c0_i32_1 = arith.constant 0 : i32
    return %c0_i32, %c0_i32_0 : i32, i32
  }
  func.func @transform_5(%arg0: i32) -> (i32, i32) {
    %c0_i32 = arith.constant 0 : i32
    %c0_i32_0 = arith.constant 0 : i32
    %c0_i32_1 = arith.constant 0 : i32
    return %c0_i32, %c0_i32_0 : i32, i32
  }
  func.func @transform_6(%arg0: i32) -> (i32, i32) {
    %c0_i32 = arith.constant 0 : i32
    %c0_i32_0 = arith.constant 0 : i32
    %c0_i32_1 = arith.constant 0 : i32
    return %c0_i32, %c0_i32_0 : i32, i32
  }
  func.func @transform_7(%arg0: i32) -> (i32, i32) {
    %c0_i32 = arith.constant 0 : i32
    %c0_i32_0 = arith.constant 0 : i32
    %c0_i32_1 = arith.constant 0 : i32
    return %c0_i32, %c0_i32_0 : i32, i32
  }
  func.func @transform_8(%arg0: i32) -> (i32, i32, i32) {
    %c0_i32 = arith.constant 0 : i32
    %c0_i32_0 = arith.constant 0 : i32
    %c0_i32_1 = arith.constant 0 : i32
    return %arg0, %c0_i32, %c0_i32_0 : i32, i32, i32
  }
}

</mosaic_0001>

<llo_original>
// kernel: multi_head_attention_xl.1
$region0: #{multi_head_attention_xl.1}
  #allocation0 [shape = 'u32[]', space=smem, size = 0x4, offset = 0x4, fixed_abs, tag = 'smem constant byte address 0x4 - core index']
  #allocation1 [shape = 'u32[144,128]{1,0:T(1,128)}', space=vmem, size = 0x12000, scoped, tag = 'internal scratch']
  #allocation2 [shape = 'f32[8,32]{1,0:T(8,128)}', space=vmem, size = 0x1000, scoped, tag = 'scratch operand']
  %s0 = inlined_call_operand.vmem [shape: bf16[2,8,32], index: 0, kind: input, shape index: {}]
  %s1 = inlined_call_operand.vmem [shape: bf16[2,16,32], index: 1, kind: input, shape index: {}]
  %s2 = inlined_call_operand.vmem [shape: bf16[4,16,8], index: 2, kind: input, shape index: {}]
  %s3 = inlined_call_operand.vmem [shape: bf16[32,32], index: 3, kind: input, shape index: {}]
  %s4 = inlined_call_operand.vmem [shape: bf16[32,64], index: 4, kind: input, shape index: {}]
  %s5 = inlined_call_operand.vmem [shape: bf16[32,32], index: 5, kind: input, shape index: {}]
  %s6 = inlined_call_operand.vmem [shape: f32[1,32], index: 6, kind: input, shape index: {}]
  %s7 = inlined_call_operand.vmem [shape: f32[1,32], index: 7, kind: input, shape index: {}]
  %s8 = inlined_call_operand.vmem [shape: f32[2,8,32], index: 8, kind: output, shape index: {}]
  %s9 = sld [smem:[#allocation0]]
  $region65: #{multi_head_attention_xl.1} parent=0
    _
  %s11 = ssub.s32 1, %s9
  %s12 = scalar_select 0, %s11, %s9
  loop: start=0, step=1, limit=4
  $region2: #{multi_head_attention_xl.1} parent=0 // loop_pre_header
    _
  $region3: #{multi_head_attention_xl.1} parent=0 // loop_header
    %s14 = sphi 0, %s18
    %p15 = scmp.ge.s32.totalorder %s14, 4
    %s24 = sphi 0, %s26
    %s27 = sphi 0, %s24
    %s28 = sphi 0, %s27
    %s44 = sphi 0, %s28
    %s50 = sphi 0, %s52
    %s53 = sphi 0, %s50
    %s54 = sphi 0, %s53
    %s70 = sphi 0, %s54
    %s74 = sphi 0, %s74
    %s76 = sphi 0, %s74
    %s77 = sphi 0, %s76
    %s91 = sphi 0, %s77
    %s95 = sphi 0, %s95
    %s97 = sphi 0, %s95
    %s98 = sphi 0, %s97
    %s112 = sphi 0, %s98
    %s116 = sphi 0, %s116
    %s118 = sphi 0, %s116
    %s119 = sphi 0, %s118
    %s133 = sphi 0, %s119
    %s137 = sphi 0, %s137
    %s139 = sphi 0, %s137
    %s140 = sphi 0, %s139
    %s154 = sphi 0, %s140
    %s158 = sphi 0, %s158
    %s160 = sphi 0, %s158
    %s161 = sphi 0, %s160
    %s175 = sphi 0, %s161
    %s179 = sphi 0, %s179
    %s181 = sphi 0, %s179
    %s182 = sphi 0, %s181
    %s196 = sphi 0, %s182
    %s202 = sphi 0, %s204
    %s205 = sphi 0, %s202
    %s206 = sphi 0, %s205
    %s222 = sphi 0, %s206
  $region4: #{multi_head_attention_xl.1} parent=0 // loop_header_branch
    %17 = sbr.rel (%p15) target = $region8
  $region5: #{multi_head_attention_xl.1} parent=0 // loop_body
    %s19 = ssub.s32 %s14, 1
    %s20 = ssub.s32 %s14, 2
    %s21 = sadd.s32 %s14, 1
    %s22 = ssub.s32 %s14, %s21
    %p23 = scmp.eq.s32.totalorder %s22, 0
    %s25 = sadd.s32 %s24, 1
    %s26 = scalar_select %p23, %s24, %s25
    %p29 = pneg %p23
    %p30 = scmp.eq.s32.totalorder %s14, 1
    %p31 = por %p29, %p30
    %p32 = scmp.ne.s32.totalorder %s24, %s27
    %p33 = scmp.eq.s32.totalorder %s14, 0
    %p34 = por %p32, %p33
    %p35 = scmp.ne.s32.totalorder %s24, %s27
    %p36 = scmp.eq.s32.totalorder %s19, 1
    %p37 = por %p35, %p36
    %p38 = scmp.ne.s32.totalorder %s27, %s28
    %p39 = scmp.eq.s32.totalorder %s19, 0
    %p40 = por %p38, %p39
    %p41 = scmp.ne.s32.totalorder %s27, %s28
    %p42 = scmp.eq.s32.totalorder %s20, 1
    %p43 = por %p41, %p42
    %p45 = scmp.ne.s32.totalorder %s28, %s44
    %p46 = scmp.eq.s32.totalorder %s20, 0
    %p47 = por %p45, %p46
    %s48 = ssub.s32 %s14, %s21
    %p49 = scmp.eq.s32.totalorder %s48, 0
    %s51 = sadd.s32 %s50, 1
    %s52 = scalar_select %p49, %s50, %s51
    %p55 = pneg %p49
    %p56 = scmp.eq.s32.totalorder %s14, 1
    %p57 = por %p55, %p56
    %p58 = scmp.ne.s32.totalorder %s50, %s53
    %p59 = scmp.eq.s32.totalorder %s14, 0
    %p60 = por %p58, %p59
    %p61 = scmp.ne.s32.totalorder %s50, %s53
    %p62 = scmp.eq.s32.totalorder %s19, 1
    %p63 = por %p61, %p62
    %p64 = scmp.ne.s32.totalorder %s53, %s54
    %p65 = scmp.eq.s32.totalorder %s19, 0
    %p66 = por %p64, %p65
    %p67 = scmp.ne.s32.totalorder %s53, %s54
    %p68 = scmp.eq.s32.totalorder %s20, 1
    %p69 = por %p67, %p68
    %p71 = scmp.ne.s32.totalorder %s54, %s70
    %p72 = scmp.eq.s32.totalorder %s20, 0
    %p73 = por %p71, %p72
    %s75 = sadd.s32 %s74, 1
    %p78 = scmp.eq.s32.totalorder %s14, 1
    %p79 = scmp.ne.s32.totalorder %s74, %s76
    %p80 = scmp.eq.s32.totalorder %s14, 0
    %p81 = por %p79, %p80
    %p82 = scmp.ne.s32.totalorder %s74, %s76
    %p83 = scmp.eq.s32.totalorder %s19, 1
    %p84 = por %p82, %p83
    %p85 = scmp.ne.s32.totalorder %s76, %s77
    %p86 = scmp.eq.s32.totalorder %s19, 0
    %p87 = por %p85, %p86
    %p88 = scmp.ne.s32.totalorder %s76, %s77
    %p89 = scmp.eq.s32.totalorder %s20, 1
    %p90 = por %p88, %p89
    %p92 = scmp.ne.s32.totalorder %s77, %s91
    %p93 = scmp.eq.s32.totalorder %s20, 0
    %p94 = por %p92, %p93
    %s96 = sadd.s32 %s95, 1
    %p99 = scmp.eq.s32.totalorder %s14, 1
    %p100 = scmp.ne.s32.totalorder %s95, %s97
    %p101 = scmp.eq.s32.totalorder %s14, 0
    %p102 = por %p100, %p101
    %p103 = scmp.ne.s32.totalorder %s95, %s97
    %p104 = scmp.eq.s32.totalorder %s19, 1
    %p105 = por %p103, %p104
    %p106 = scmp.ne.s32.totalorder %s97, %s98
    %p107 = scmp.eq.s32.totalorder %s19, 0
    %p108 = por %p106, %p107
    %p109 = scmp.ne.s32.totalorder %s97, %s98
    %p110 = scmp.eq.s32.totalorder %s20, 1
    %p111 = por %p109, %p110
    %p113 = scmp.ne.s32.totalorder %s98, %s112
    %p114 = scmp.eq.s32.totalorder %s20, 0
    %p115 = por %p113, %p114
    %s117 = sadd.s32 %s116, 1
    %p120 = scmp.eq.s32.totalorder %s14, 1
    %p121 = scmp.ne.s32.totalorder %s116, %s118
    %p122 = scmp.eq.s32.totalorder %s14, 0
    %p123 = por %p121, %p122
    %p124 = scmp.ne.s32.totalorder %s116, %s118
    %p125 = scmp.eq.s32.totalorder %s19, 1
    %p126 = por %p124, %p125
    %p127 = scmp.ne.s32.totalorder %s118, %s119
    %p128 = scmp.eq.s32.totalorder %s19, 0
    %p129 = por %p127, %p128
    %p130 = scmp.ne.s32.totalorder %s118, %s119
    %p131 = scmp.eq.s32.totalorder %s20, 1
    %p132 = por %p130, %p131
    %p134 = scmp.ne.s32.totalorder %s119, %s133
    %p135 = scmp.eq.s32.totalorder %s20, 0
    %p136 = por %p134, %p135
    %s138 = sadd.s32 %s137, 1
    %p141 = scmp.eq.s32.totalorder %s14, 1
    %p142 = scmp.ne.s32.totalorder %s137, %s139
    %p143 = scmp.eq.s32.totalorder %s14, 0
    %p144 = por %p142, %p143
    %p145 = scmp.ne.s32.totalorder %s137, %s139
    %p146 = scmp.eq.s32.totalorder %s19, 1
    %p147 = por %p145, %p146
    %p148 = scmp.ne.s32.totalorder %s139, %s140
    %p149 = scmp.eq.s32.totalorder %s19, 0
    %p150 = por %p148, %p149
    %p151 = scmp.ne.s32.totalorder %s139, %s140
    %p152 = scmp.eq.s32.totalorder %s20, 1
    %p153 = por %p151, %p152
    %p155 = scmp.ne.s32.totalorder %s140, %s154
    %p156 = scmp.eq.s32.totalorder %s20, 0
    %p157 = por %p155, %p156
    %s159 = sadd.s32 %s158, 1
    %p162 = scmp.eq.s32.totalorder %s14, 1
    %p163 = scmp.ne.s32.totalorder %s158, %s160
    %p164 = scmp.eq.s32.totalorder %s14, 0
    %p165 = por %p163, %p164
    %p166 = scmp.ne.s32.totalorder %s158, %s160
    %p167 = scmp.eq.s32.totalorder %s19, 1
    %p168 = por %p166, %p167
    %p169 = scmp.ne.s32.totalorder %s160, %s161
    %p170 = scmp.eq.s32.totalorder %s19, 0
    %p171 = por %p169, %p170
    %p172 = scmp.ne.s32.totalorder %s160, %s161
    %p173 = scmp.eq.s32.totalorder %s20, 1
    %p174 = por %p172, %p173
    %p176 = scmp.ne.s32.totalorder %s161, %s175
    %p177 = scmp.eq.s32.totalorder %s20, 0
    %p178 = por %p176, %p177
    %s180 = sadd.s32 %s179, 1
    %p183 = scmp.eq.s32.totalorder %s14, 1
    %p184 = scmp.ne.s32.totalorder %s179, %s181
    %p185 = scmp.eq.s32.totalorder %s14, 0
    %p186 = por %p184, %p185
    %p187 = scmp.ne.s32.totalorder %s179, %s181
    %p188 = scmp.eq.s32.totalorder %s19, 1
    %p189 = por %p187, %p188
    %p190 = scmp.ne.s32.totalorder %s181, %s182
    %p191 = scmp.eq.s32.totalorder %s19, 0
    %p192 = por %p190, %p191
    %p193 = scmp.ne.s32.totalorder %s181, %s182
    %p194 = scmp.eq.s32.totalorder %s20, 1
    %p195 = por %p193, %p194
    %p197 = scmp.ne.s32.totalorder %s182, %s196
    %p198 = scmp.eq.s32.totalorder %s20, 0
    %p199 = por %p197, %p198
    %s200 = ssub.s32 %s14, %s21
    %p201 = scmp.eq.s32.totalorder %s200, 0
    %s203 = sadd.s32 %s202, 1
    %s204 = scalar_select %p201, %s202, %s203
    %p207 = pneg %p201
    %p208 = scmp.eq.s32.totalorder %s14, 1
    %p209 = por %p207, %p208
    %p210 = scmp.ne.s32.totalorder %s202, %s205
    %p211 = scmp.eq.s32.totalorder %s14, 0
    %p212 = por %p210, %p211
    %p213 = scmp.ne.s32.totalorder %s202, %s205
    %p214 = scmp.eq.s32.totalorder %s19, 1
    %p215 = por %p213, %p214
    %p216 = scmp.ne.s32.totalorder %s205, %s206
    %p217 = scmp.eq.s32.totalorder %s19, 0
    %p218 = por %p216, %p217
    %p219 = scmp.ne.s32.totalorder %s205, %s206
    %p220 = scmp.eq.s32.totalorder %s20, 1
    %p221 = por %p219, %p220
    %p223 = scmp.ne.s32.totalorder %s206, %s222
    %p224 = scmp.eq.s32.totalorder %s20, 0
    %p225 = por %p223, %p224
    %p226 = scmp.le.s32.totalorder 1, %s14
    %p227 = scmp.lt.s32.totalorder %s14, 3
    %p228 = pnand %p226, %p227
    %p229 = pneg %p228
    // Predicated region
    $region9: #{multi_head_attention_xl.1} parent=5 // pred_check
      _
    $region10: #{multi_head_attention_xl.1} parent=5 // pred_check_branch
      %231 = sbr.rel (%p228) target = $region12
    $region11: #{multi_head_attention_xl.1} parent=5 // pred_region
      %s232 = ssub.s32 %s14, 1
      // Predicated region
      $region13: #{multi_head_attention_xl.1} parent=11 // pred_check
        %p233 = pneg %p87
      $region14: #{multi_head_attention_xl.1} parent=11 // pred_check_branch
        %235 = sbr.rel (%p233) target = $region16
      $region15: #{multi_head_attention_xl.1} parent=11 // pred_region
        _
      $region16: #{multi_head_attention_xl.1} parent=11 // pred_fallthru
        _
      // Predicated region
      $region17: #{multi_head_attention_xl.1} parent=11 // pred_check
        %p236 = pneg %p108
      $region18: #{multi_head_attention_xl.1} parent=11 // pred_check_branch
        %238 = sbr.rel (%p236) target = $region20
      $region19: #{multi_head_attention_xl.1} parent=11 // pred_region
        _
      $region20: #{multi_head_attention_xl.1} parent=11 // pred_fallthru
        _
      // Predicated region
      $region21: #{multi_head_attention_xl.1} parent=11 // pred_check
        %p239 = pneg %p129
      $region22: #{multi_head_attention_xl.1} parent=11 // pred_check_branch
        %241 = sbr.rel (%p239) target = $region24
      $region23: #{multi_head_attention_xl.1} parent=11 // pred_region
        _
      $region24: #{multi_head_attention_xl.1} parent=11 // pred_fallthru
        _
      // Predicated region
      $region25: #{multi_head_attention_xl.1} parent=11 // pred_check
        %p242 = pneg %p150
      $region26: #{multi_head_attention_xl.1} parent=11 // pred_check_branch
        %244 = sbr.rel (%p242) target = $region28
      $region27: #{multi_head_attention_xl.1} parent=11 // pred_region
        _
      $region28: #{multi_head_attention_xl.1} parent=11 // pred_fallthru
        _
      // Predicated region
      $region29: #{multi_head_attention_xl.1} parent=11 // pred_check
        %p245 = pneg %p171
      $region30: #{multi_head_attention_xl.1} parent=11 // pred_check_branch
        %247 = sbr.rel (%p245) target = $region32
      $region31: #{multi_head_attention_xl.1} parent=11 // pred_region
        _
      $region32: #{multi_head_attention_xl.1} parent=11 // pred_fallthru
        _
      // Predicated region
      $region33: #{multi_head_attention_xl.1} parent=11 // pred_check
        %p248 = pneg %p192
      $region34: #{multi_head_attention_xl.1} parent=11 // pred_check_branch
        %250 = sbr.rel (%p248) target = $region36
      $region35: #{multi_head_attention_xl.1} parent=11 // pred_region
        _
      $region36: #{multi_head_attention_xl.1} parent=11 // pred_fallthru
        _
    $region12: #{multi_head_attention_xl.1} parent=5 // pred_fallthru
      _
    %p251 = scmp.lt.s32.totalorder %s14, 2
    // Predicated region
    $region37: #{multi_head_attention_xl.1} parent=5 // pred_check
      %p252 = pneg %p251
    $region38: #{multi_head_attention_xl.1} parent=5 // pred_check_branch
      %254 = sbr.rel (%p252) target = $region40
    $region39: #{multi_head_attention_xl.1} parent=5 // pred_region
      // Predicated region
      $region41: #{multi_head_attention_xl.1} parent=39 // pred_check
        %p255 = pneg %p34
      $region42: #{multi_head_attention_xl.1} parent=39 // pred_check_branch
        %257 = sbr.rel (%p255) target = $region44
      $region43: #{multi_head_attention_xl.1} parent=39 // pred_region
        %p258 = scmp.lt.s32.totalorder %s14, 1
        %s259 = scalar_select %p258, %s14, 1
        %s260 = smul.addr %s259, 4
        %s261 = scalar_lea.vmem %s0, %s260
      $region44: #{multi_head_attention_xl.1} parent=39 // pred_fallthru
        _
      // Predicated region
      $region45: #{multi_head_attention_xl.1} parent=39 // pred_check
        %p262 = pneg %p60
      $region46: #{multi_head_attention_xl.1} parent=39 // pred_check_branch
        %264 = sbr.rel (%p262) target = $region48
      $region47: #{multi_head_attention_xl.1} parent=39 // pred_region
        %p265 = scmp.lt.s32.totalorder %s14, 1
        %s266 = scalar_select %p265, %s14, 1
        %s267 = smul.addr %s266, 2
        %s268 = smul.addr %s267, 4
        %s269 = scalar_lea.vmem %s1, %s268
      $region48: #{multi_head_attention_xl.1} parent=39 // pred_fallthru
        _
    $region40: #{multi_head_attention_xl.1} parent=5 // pred_fallthru
      _
    %p270 = scmp.le.s32.totalorder 1, %s14
    %p271 = scmp.lt.s32.totalorder %s14, 3
    %p272 = pnand %p270, %p271
    %p273 = pneg %p272
    // Predicated region
    $region49: #{multi_head_attention_xl.1} parent=5 // pred_check
      _
    $region50: #{multi_head_attention_xl.1} parent=5 // pred_check_branch
      %275 = sbr.rel (%p272) target = $region52
    $region51: #{multi_head_attention_xl.1} parent=5 // pred_region
      %s276 = ssub.s32 %s14, 1
      %p277 = scmp.lt.s32.totalorder %s19, 1
      %s278 = scalar_select %p277, %s19, 1
      %s279 = smul.addr %s278, 4
      %s280 = scalar_lea.vmem %s0, %s279
      %p281 = pneg %p40
      %p282 = pneg %p37
      %p283 = scmp.lt.s32.totalorder %s19, 1
      %s284 = scalar_select %p283, %s19, 1
      %s285 = smul.addr %s284, 2
      %s286 = smul.addr %s285, 4
      %s287 = scalar_lea.vmem %s1, %s286
      %p288 = pneg %p66
      %p289 = pneg %p63
      %p290 = pneg %p87
      %p291 = pneg %p84
      %p292 = pneg %p108
      %p293 = pneg %p105
      %p294 = pneg %p129
      %p295 = pneg %p126
      %p296 = pneg %p150
      %p297 = pneg %p147
      %p298 = pneg %p171
      %p299 = pneg %p168
      %p300 = pneg %p192
      %p301 = pneg %p189
      %p302 = pneg %p218
      %p303 = pneg %p215
      %p304 = scmp.lt.s32.totalorder %s19, 1
      %s305 = scalar_select %p304, %s19, 1
      %s306 = smul.addr %s305, 8
      %s307 = scalar_lea.vmem %s8, %s306
      %p308 = scmp.lt.s32.totalorder %s19, 1
      %s309 = scalar_select %p308, %s19, 1
      %s310 = smul.addr %s309, 4
      %s311 = scalar_lea.vmem %s0, %s310
      %p312 = scmp.lt.s32.totalorder %s19, 1
      %s313 = scalar_select %p312, %s19, 1
      %s314 = smul.addr %s313, 2
      %s315 = smul.addr %s314, 4
      %s316 = scalar_lea.vmem %s1, %s315
      %p317 = scmp.lt.s32.totalorder %s19, 1
      %s318 = scalar_select %p317, %s19, 1
      %s319 = smul.addr %s318, 8
      %s320 = scalar_lea.vmem %s8, %s319
      %v322 = vld [vmem:[%s311] sm:$0xf]
      %v323 = vld [vmem:[%s316] sm:$0xf]
      %v324 = vld [vmem:[%s316 + $0x4] sm:$0xf]
      %v325 = vld [vmem:[%s3] sm:$0xf]
      %v326 = vld [vmem:[%s3 + $0x4] sm:$0xf]
      %v327 = vld [vmem:[%s3 + $0x8] sm:$0xf]
      %v328 = vld [vmem:[%s3 + $0xc] sm:$0xf]
      %v333 = vunpack.c.l.b16 %v325
      %v334 = vunpack.c.l.b16 %v326
      %v335 = vunpack.c.l.b16 %v327
      %v336 = vunpack.c.l.b16 %v328
      %v337 = vpack.c.b16 %v334, %v333
      %v338 = vpack.c.b16 %v336, %v335
      %vm341 = vcmask 261120
      %v343 = vsel %vm341, %v322, 0
      %345 = vmatprep.subr.bf16.mxu0 0
      %346 = vmatpush1.bf16.msra.mxu0 %v337
      %347 = vmatprep.subr.bf16.mxu0 0
      %348 = vmatpush1.bf16.msra.mxu0 %v338
      %349 = vmatprep.subr.bf16.mxu0 0
      %350 = vmatpush1.bf16.msra.mxu0 0
      %351 = vmatprep.subr.bf16.mxu0 0
      %352 = vmatpush1.bf16.msra.mxu0 0
      %353 = vmatprep.subr.bf16.mxu0 0
      %354 = vmatpush1.bf16.msra.mxu0 0
      %355 = vmatprep.subr.bf16.mxu0 0
      %356 = vmatpush1.bf16.msra.mxu0 0
      %357 = vmatprep.subr.bf16.mxu0 0
      %358 = vmatpush1.bf16.msra.mxu0 0
      %359 = vmatprep.subr.bf16.mxu0 0
      %360 = vmatpush1.bf16.msra.mxu0 0
      %361 = vmatprep.subr.bf16.mxu0 0
      %362 = vmatpush1.bf16.msra.mxu0 0
      %363 = vmatprep.subr.bf16.mxu0 0
      %364 = vmatpush1.bf16.msra.mxu0 0
      %365 = vmatprep.subr.bf16.mxu0 0
      %366 = vmatpush1.bf16.msra.mxu0 0
      %367 = vmatprep.subr.bf16.mxu0 0
      %368 = vmatpush1.bf16.msra.mxu0 0
      %369 = vmatprep.subr.bf16.mxu0 0
      %370 = vmatpush1.bf16.msra.mxu0 0
      %371 = vmatprep.subr.bf16.mxu0 0
      %372 = vmatpush1.bf16.msra.mxu0 0
      %373 = vmatprep.subr.bf16.mxu0 0
      %374 = vmatpush1.bf16.msra.mxu0 0
      %375 = vmatprep.subr.bf16.mxu0 0
      %376 = vmatpush1.bf16.msra.mxu0 0
      %377 = vmatprep.mubr.bf16.mxu0 0
      %378 = vmatmul.mubr.bf16.gmra.mrb[0].mxu0 %v343
      %v379 = vpop.f32.mrb[0].mxu0
      %v380 = vadd.f32 0.0, %v379
      %v381 = vpop.f32.mrb[0].mxu0
      %v382 = vpop.f32.mrb[0].mxu0
      %v383 = vpop.f32.mrb[0].mxu0
      %384 = vdwg.mxu0
      %v385 = vld [vmem:[%s4] sm:$0xf]
      %v386 = vld [vmem:[%s4 + $0x4] sm:$0xf]
      %v387 = vld [vmem:[%s4 + $0x8] sm:$0xf]
      %v388 = vld [vmem:[%s4 + $0xc] sm:$0xf]
      %v391 = vunpack.c.l.b16 %v323
      %v392 = vunpack.c.l.b16 %v324
      %v393 = vpack.c.b16 %v392, %v391
      %v398 = vunpack.c.l.b16 %v385
      %v399 = vunpack.c.l.b16 %v386
      %v400 = vunpack.c.l.b16 %v387
      %v401 = vunpack.c.l.b16 %v388
      %v402 = vpack.c.b16 %v399, %v398
      %v403 = vpack.c.b16 %v401, %v400
      %v407 = vsel %vm341, %v393, 0
      %409 = vmatprep.subr.bf16.mxu0 0
      %410 = vmatpush1.bf16.msra.mxu0 %v402
      %411 = vmatprep.subr.bf16.mxu0 0
      %412 = vmatpush1.bf16.msra.mxu0 %v403
      %413 = vmatprep.subr.bf16.mxu0 0
      %414 = vmatpush1.bf16.msra.mxu0 0
      %415 = vmatprep.subr.bf16.mxu0 0
      %416 = vmatpush1.bf16.msra.mxu0 0
      %417 = vmatprep.subr.bf16.mxu0 0
      %418 = vmatpush1.bf16.msra.mxu0 0
      %419 = vmatprep.subr.bf16.mxu0 0
      %420 = vmatpush1.bf16.msra.mxu0 0
      %421 = vmatprep.subr.bf16.mxu0 0
      %422 = vmatpush1.bf16.msra.mxu0 0
      %423 = vmatprep.subr.bf16.mxu0 0
      %424 = vmatpush1.bf16.msra.mxu0 0
      %425 = vmatprep.subr.bf16.mxu0 0
      %426 = vmatpush1.bf16.msra.mxu0 0
      %427 = vmatprep.subr.bf16.mxu0 0
      %428 = vmatpush1.bf16.msra.mxu0 0
      %429 = vmatprep.subr.bf16.mxu0 0
      %430 = vmatpush1.bf16.msra.mxu0 0
      %431 = vmatprep.subr.bf16.mxu0 0
      %432 = vmatpush1.bf16.msra.mxu0 0
      %433 = vmatprep.subr.bf16.mxu0 0
      %434 = vmatpush1.bf16.msra.mxu0 0
      %435 = vmatprep.subr.bf16.mxu0 0
      %436 = vmatpush1.bf16.msra.mxu0 0
      %437 = vmatprep.subr.bf16.mxu0 0
      %438 = vmatpush1.bf16.msra.mxu0 0
      %439 = vmatprep.subr.bf16.mxu0 0
      %440 = vmatpush1.bf16.msra.mxu0 0
      %441 = vmatprep.mubr.bf16.mxu0 0
      %442 = vmatmul.mubr.bf16.gmra.mrb[0].mxu0 %v407
      %v443 = vpop.f32.mrb[0].mxu0
      %v444 = vadd.f32 0.0, %v443
      %v445 = vpop.f32.mrb[0].mxu0
      %v446 = vpop.f32.mrb[0].mxu0
      %v447 = vadd.f32 0.0, %v446
      %v448 = vpop.f32.mrb[0].mxu0
      %449 = vdwg.mxu0
      %v450 = vpack.c.bf16 %v447, %v444
      %v451 = vld [vmem:[%s6] sm:$0x1]
      %v453 = vlaneseq
      %v454 = vshrl.u32 %v453, 7
      %v455 = vsub.s32 0, %v454
      %v456 = vrot.slane %v451, %v455
      %v458 = vadd.f32 %v380, %v456
      %v459 = vpack.c.bf16 %v458, %v458
      %v460 = vld [vmem:[%s7] sm:$0x1]
      %v462 = vlaneseq
      %v463 = vshrl.u32 %v462, 7
      %v464 = vsub.s32 0, %v463
      %v465 = vrot.slane %v460, %v464
      %v467 = vadd.f32 %v380, %v465
      %v468 = vpack.c.bf16 %v467, %v467
      %v469 = vld [vmem:[%s2] sm:$0xf]
      %v470 = vld [vmem:[%s2 + $0x4] sm:$0xf]
      %v473 = vunpack.c.l.b16 %v469
      %v474 = vunpack.c.l.b16 %v470
      %v475 = vpack.c.b16 %v474, %v473
      %vm476 = vcmask 64512
      %v478 = vsel %vm476, %v468, 0
      %v481 = vsel %vm476, %v475, 0
      %483 = vmatprep.subr.bf16.mxu0 0
      %484 = vmatpush1.bf16.xpose.msra.mxu0 %v481
      %485 = vmatprep.subr.bf16.mxu0 0
      %486 = vmatpush1.bf16.xpose.msra.mxu0 0
      %487 = vmatprep.subr.bf16.mxu0 0
      %488 = vmatpush1.bf16.xpose.msra.mxu0 0
      %489 = vmatprep.subr.bf16.mxu0 0
      %490 = vmatpush1.bf16.xpose.msra.mxu0 0
      %491 = vmatprep.subr.bf16.mxu0 0
      %492 = vmatpush1.bf16.xpose.msra.mxu0 0
      %493 = vmatprep.subr.bf16.mxu0 0
      %494 = vmatpush1.bf16.xpose.msra.mxu0 0
      %495 = vmatprep.subr.bf16.mxu0 0
      %496 = vmatpush1.bf16.xpose.msra.mxu0 0
      %497 = vmatprep.subr.bf16.mxu0 0
      %498 = vmatpush1.bf16.xpose.msra.mxu0 0
      %499 = vmatprep.subr.bf16.mxu0 0
      %500 = vmatpush1.bf16.xpose.msra.mxu0 0
      %501 = vmatprep.subr.bf16.mxu0 0
      %502 = vmatpush1.bf16.xpose.msra.mxu0 0
      %503 = vmatprep.subr.bf16.mxu0 0
      %504 = vmatpush1.bf16.xpose.msra.mxu0 0
      %505 = vmatprep.subr.bf16.mxu0 0
      %506 = vmatpush1.bf16.xpose.msra.mxu0 0
      %507 = vmatprep.subr.bf16.mxu0 0
      %508 = vmatpush1.bf16.xpose.msra.mxu0 0
      %509 = vmatprep.subr.bf16.mxu0 0
      %510 = vmatpush1.bf16.xpose.msra.mxu0 0
      %511 = vmatprep.subr.bf16.mxu0 0
      %512 = vmatpush1.bf16.xpose.msra.mxu0 0
      %513 = vmatprep.subr.bf16.mxu0 0
      %514 = vmatpush1.bf16.xpose.msra.mxu0 0
      %515 = vmatprep.mubr.bf16.mxu0 0
      %516 = vmatmul.mubr.bf16.gmra.mrb[0].mxu0 %v478
      %v517 = vpop.f32.mrb[0].mxu0
      %v518 = vadd.f32 0.0, %v517
      %v519 = vpop.f32.mrb[0].mxu0
      %v520 = vpop.f32.mrb[0].mxu0
      %v521 = vpop.f32.mrb[0].mxu0
      %522 = vdwg.mxu0
      %524 = vrot.lane.b32.xlu0 %v518, 121
      %v525 = vpop.permute.xlu0 %524
      %v527 = vrot.slane %v518, 1
      %528 = vrot.lane.b32.xlu0 %v527, 10
      %v529 = vpop.permute.xlu0 %528
      %vm531 = vcmask 72704
      %v532 = vsel %vm531, %v525, 0.0
      %vm533 = vcmask 80896
      %v534 = vsel %vm533, %v532, %v529
      %535 = vrot.lane.b32.xlu0 %v518, 122
      %v536 = vpop.permute.xlu0 %535
      %538 = vrot.lane.b32.xlu0 %v527, 11
      %v539 = vpop.permute.xlu0 %538
      %v541 = vsel %vm533, %v536, 0.0
      %vm542 = vcmask 89088
      %v543 = vsel %vm542, %v541, %v539
      %544 = vrot.lane.b32.xlu0 %v518, 123
      %v545 = vpop.permute.xlu0 %544
      %547 = vrot.lane.b32.xlu0 %v527, 12
      %v548 = vpop.permute.xlu0 %547
      %v550 = vsel %vm542, %v545, 0.0
      %vm551 = vcmask 97280
      %v552 = vsel %vm551, %v550, %v548
      %553 = vrot.lane.b32.xlu0 %v518, 124
      %v554 = vpop.permute.xlu0 %553
      %556 = vrot.lane.b32.xlu0 %v527, 13
      %v557 = vpop.permute.xlu0 %556
      %v559 = vsel %vm551, %v554, 0.0
      %vm560 = vcmask 105472
      %v561 = vsel %vm560, %v559, %v557
      %562 = vrot.lane.b32.xlu0 %v518, 125
      %v563 = vpop.permute.xlu0 %562
      %565 = vrot.lane.b32.xlu0 %v527, 14
      %v566 = vpop.permute.xlu0 %565
      %v568 = vsel %vm560, %v563, 0.0
      %vm569 = vcmask 113664
      %v570 = vsel %vm569, %v568, %v566
      %571 = vrot.lane.b32.xlu0 %v518, 126
      %v572 = vpop.permute.xlu0 %571
      %574 = vrot.lane.b32.xlu0 %v527, 15
      %v575 = vpop.permute.xlu0 %574
      %v577 = vsel %vm569, %v572, 0.0
      %vm578 = vcmask 121856
      %v579 = vsel %vm578, %v577, %v575
      %580 = vrot.lane.b32.xlu0 %v518, 127
      %v581 = vpop.permute.xlu0 %580
      %v583 = vsel %vm578, %v581, 0.0
      %vm584 = vcmask 1040384
      %v585 = vsel %vm584, %v534, %v543
      %vm586 = vcmask 1041408
      %v587 = vsel %vm586, %v585, %v552
      %vm588 = vcmask 1042432
      %v589 = vsel %vm588, %v587, %v561
      %vm590 = vcmask 1043456
      %v591 = vsel %vm590, %v589, %v570
      %vm592 = vcmask 1044480
      %v593 = vsel %vm592, %v591, %v579
      %vm594 = vcmask 1045504
      %v595 = vsel %vm594, %v593, %v583
      %vm596 = vcmask 1046528
      %v597 = vsel %vm596, %v595, %v518
      %v599 = vsel %vm476, %v459, 0
      %v602 = vsel %vm476, %v450, 0
      %604 = vmatprep.subr.bf16.mxu0 0
      %605 = vmatpush1.bf16.xpose.msra.mxu0 %v602
      %606 = vmatprep.subr.bf16.mxu0 0
      %607 = vmatpush1.bf16.xpose.msra.mxu0 0
      %608 = vmatprep.subr.bf16.mxu0 0
      %609 = vmatpush1.bf16.xpose.msra.mxu0 0
      %610 = vmatprep.subr.bf16.mxu0 0
      %611 = vmatpush1.bf16.xpose.msra.mxu0 0
      %612 = vmatprep.subr.bf16.mxu0 0
      %613 = vmatpush1.bf16.xpose.msra.mxu0 0
      %614 = vmatprep.subr.bf16.mxu0 0
      %615 = vmatpush1.bf16.xpose.msra.mxu0 0
      %616 = vmatprep.subr.bf16.mxu0 0
      %617 = vmatpush1.bf16.xpose.msra.mxu0 0
      %618 = vmatprep.subr.bf16.mxu0 0
      %619 = vmatpush1.bf16.xpose.msra.mxu0 0
      %620 = vmatprep.subr.bf16.mxu0 0
      %621 = vmatpush1.bf16.xpose.msra.mxu0 0
      %622 = vmatprep.subr.bf16.mxu0 0
      %623 = vmatpush1.bf16.xpose.msra.mxu0 0
      %624 = vmatprep.subr.bf16.mxu0 0
      %625 = vmatpush1.bf16.xpose.msra.mxu0 0
      %626 = vmatprep.subr.bf16.mxu0 0
      %627 = vmatpush1.bf16.xpose.msra.mxu0 0
      %628 = vmatprep.subr.bf16.mxu0 0
      %629 = vmatpush1.bf16.xpose.msra.mxu0 0
      %630 = vmatprep.subr.bf16.mxu0 0
      %631 = vmatpush1.bf16.xpose.msra.mxu0 0
      %632 = vmatprep.subr.bf16.mxu0 0
      %633 = vmatpush1.bf16.xpose.msra.mxu0 0
      %634 = vmatprep.subr.bf16.mxu0 0
      %635 = vmatpush1.bf16.xpose.msra.mxu0 0
      %636 = vmatprep.mubr.bf16.mxu0 0
      %637 = vmatmul.mubr.bf16.gmra.mrb[0].mxu0 %v599
      %v638 = vpop.f32.mrb[0].mxu0
      %v639 = vadd.f32 %v597, %v638
      %v640 = vpop.f32.mrb[0].mxu0
      %v641 = vpop.f32.mrb[0].mxu0
      %v642 = vpop.f32.mrb[0].mxu0
      %643 = vdwg.mxu0
      %vm644 = vcmask 130048
      %v645 = vsel %vm644, %v639, -inf
      %646 = vmax.xlane.f32.xlu0 %v645
      %v647 = vpop.xlane.xlu0 %646
      %v648 = vsub.f32 %v639, %v647
      %v649 = vmul.f32 %v648, 1.442695
      %v650 = vpow.pop %v649
      %v651 = vsel %vm644, %v650, 0.0
      %652 = vadd.xlane.f32.xlu0 %v651
      %v653 = vpop.xlane.xlu0 %652
      %v654 = vrcp.pop %v653
      %v655 = vmul.f32 %v650, %v654
      %v656 = vpack.c.bf16 %v655, %v655
      %658 = vrot.lane.b32.xlu0 %v450, 96
      %v659 = vpop.permute.xlu0 %658
      %v662 = vsel %vm644, %v656, 0
      %664 = vmatprep.subr.bf16.mxu0 0
      %665 = vmatpush1.bf16.msra.mxu0 %v659
      %666 = vmatprep.subr.bf16.mxu0 0
      %667 = vmatpush1.bf16.msra.mxu0 0
      %668 = vmatprep.subr.bf16.mxu0 0
      %669 = vmatpush1.bf16.msra.mxu0 0
      %670 = vmatprep.subr.bf16.mxu0 0
      %671 = vmatpush1.bf16.msra.mxu0 0
      %672 = vmatprep.subr.bf16.mxu0 0
      %673 = vmatpush1.bf16.msra.mxu0 0
      %674 = vmatprep.subr.bf16.mxu0 0
      %675 = vmatpush1.bf16.msra.mxu0 0
      %676 = vmatprep.subr.bf16.mxu0 0
      %677 = vmatpush1.bf16.msra.mxu0 0
      %678 = vmatprep.subr.bf16.mxu0 0
      %679 = vmatpush1.bf16.msra.mxu0 0
      %680 = vmatprep.subr.bf16.mxu0 0
      %681 = vmatpush1.bf16.msra.mxu0 0
      %682 = vmatprep.subr.bf16.mxu0 0
      %683 = vmatpush1.bf16.msra.mxu0 0
      %684 = vmatprep.subr.bf16.mxu0 0
      %685 = vmatpush1.bf16.msra.mxu0 0
      %686 = vmatprep.subr.bf16.mxu0 0
      %687 = vmatpush1.bf16.msra.mxu0 0
      %688 = vmatprep.subr.bf16.mxu0 0
      %689 = vmatpush1.bf16.msra.mxu0 0
      %690 = vmatprep.subr.bf16.mxu0 0
      %691 = vmatpush1.bf16.msra.mxu0 0
      %692 = vmatprep.subr.bf16.mxu0 0
      %693 = vmatpush1.bf16.msra.mxu0 0
      %694 = vmatprep.subr.bf16.mxu0 0
      %695 = vmatpush1.bf16.msra.mxu0 0
      %696 = vmatprep.mubr.bf16.mxu0 0
      %697 = vmatmul.mubr.bf16.gmra.mrb[0].mxu0 %v662
      %v698 = vpop.f32.mrb[0].mxu0
      %v699 = vadd.f32 0.0, %v698
      %v700 = vpop.f32.mrb[0].mxu0
      %v701 = vpop.f32.mrb[0].mxu0
      %v702 = vpop.f32.mrb[0].mxu0
      %703 = vdwg.mxu0
      %704 = vst.msk [vmem:[#allocation2] sm:$0xff] %vm476, %v699
      %s705 = scalar_lea.vmem %s2, 8
      %v706 = vld [vmem:[%s705] sm:$0xf]
      %v707 = vld [vmem:[%s705 + $0x4] sm:$0xf]
      %709 = vrot.lane.b32.xlu0 %v468, 120
      %v710 = vpop.permute.xlu0 %709
      %v713 = vunpack.c.l.b16 %v706
      %v714 = vunpack.c.l.b16 %v707
      %v715 = vpack.c.b16 %v714, %v713
      %v717 = vsel %vm476, %v710, 0
      %v720 = vsel %vm476, %v715, 0
      %722 = vmatprep.subr.bf16.mxu0 0
      %723 = vmatpush1.bf16.xpose.msra.mxu0 %v720
      %724 = vmatprep.subr.bf16.mxu0 0
      %725 = vmatpush1.bf16.xpose.msra.mxu0 0
      %726 = vmatprep.subr.bf16.mxu0 0
      %727 = vmatpush1.bf16.xpose.msra.mxu0 0
      %728 = vmatprep.subr.bf16.mxu0 0
      %729 = vmatpush1.bf16.xpose.msra.mxu0 0
      %730 = vmatprep.subr.bf16.mxu0 0
      %731 = vmatpush1.bf16.xpose.msra.mxu0 0
      %732 = vmatprep.subr.bf16.mxu0 0
      %733 = vmatpush1.bf16.xpose.msra.mxu0 0
      %734 = vmatprep.subr.bf16.mxu0 0
      %735 = vmatpush1.bf16.xpose.msra.mxu0 0
      %736 = vmatprep.subr.bf16.mxu0 0
      %737 = vmatpush1.bf16.xpose.msra.mxu0 0
      %738 = vmatprep.subr.bf16.mxu0 0
      %739 = vmatpush1.bf16.xpose.msra.mxu0 0
      %740 = vmatprep.subr.bf16.mxu0 0
      %741 = vmatpush1.bf16.xpose.msra.mxu0 0
      %742 = vmatprep.subr.bf16.mxu0 0
      %743 = vmatpush1.bf16.xpose.msra.mxu0 0
      %744 = vmatprep.subr.bf16.mxu0 0
      %745 = vmatpush1.bf16.xpose.msra.mxu0 0
      %746 = vmatprep.subr.bf16.mxu0 0
      %747 = vmatpush1.bf16.xpose.msra.mxu0 0
      %748 = vmatprep.subr.bf16.mxu0 0
      %749 = vmatpush1.bf16.xpose.msra.mxu0 0
      %750 = vmatprep.subr.bf16.mxu0 0
      %751 = vmatpush1.bf16.xpose.msra.mxu0 0
      %752 = vmatprep.subr.bf16.mxu0 0
      %753 = vmatpush1.bf16.xpose.msra.mxu0 0
      %754 = vmatprep.mubr.bf16.mxu0 0
      %755 = vmatmul.mubr.bf16.gmra.mrb[0].mxu0 %v717
      %v756 = vpop.f32.mrb[0].mxu0
      %v757 = vadd.f32 0.0, %v756
      %v758 = vpop.f32.mrb[0].mxu0
      %v759 = vpop.f32.mrb[0].mxu0
      %v760 = vpop.f32.mrb[0].mxu0
      %761 = vdwg.mxu0
      %763 = vrot.lane.b32.xlu0 %v757, 121
      %v764 = vpop.permute.xlu0 %763
      %v766 = vrot.slane %v757, 1
      %767 = vrot.lane.b32.xlu0 %v766, 10
      %v768 = vpop.permute.xlu0 %767
      %v770 = vsel %vm531, %v764, 0.0
      %v771 = vsel %vm533, %v770, %v768
      %772 = vrot.lane.b32.xlu0 %v757, 122
      %v773 = vpop.permute.xlu0 %772
      %775 = vrot.lane.b32.xlu0 %v766, 11
      %v776 = vpop.permute.xlu0 %775
      %v778 = vsel %vm533, %v773, 0.0
      %v779 = vsel %vm542, %v778, %v776
      %780 = vrot.lane.b32.xlu0 %v757, 123
      %v781 = vpop.permute.xlu0 %780
      %783 = vrot.lane.b32.xlu0 %v766, 12
      %v784 = vpop.permute.xlu0 %783
      %v786 = vsel %vm542, %v781, 0.0
      %v787 = vsel %vm551, %v786, %v784
      %788 = vrot.lane.b32.xlu0 %v757, 124
      %v789 = vpop.permute.xlu0 %788
      %791 = vrot.lane.b32.xlu0 %v766, 13
      %v792 = vpop.permute.xlu0 %791
      %v794 = vsel %vm551, %v789, 0.0
      %v795 = vsel %vm560, %v794, %v792
      %796 = vrot.lane.b32.xlu0 %v757, 125
      %v797 = vpop.permute.xlu0 %796
      %799 = vrot.lane.b32.xlu0 %v766, 14
      %v800 = vpop.permute.xlu0 %799
      %v802 = vsel %vm560, %v797, 0.0
      %v803 = vsel %vm569, %v802, %v800
      %804 = vrot.lane.b32.xlu0 %v757, 126
      %v805 = vpop.permute.xlu0 %804
      %807 = vrot.lane.b32.xlu0 %v766, 15
      %v808 = vpop.permute.xlu0 %807
      %v810 = vsel %vm569, %v805, 0.0
      %v811 = vsel %vm578, %v810, %v808
      %812 = vrot.lane.b32.xlu0 %v757, 127
      %v813 = vpop.permute.xlu0 %812
      %v815 = vsel %vm578, %v813, 0.0
      %v816 = vsel %vm584, %v771, %v779
      %v817 = vsel %vm586, %v816, %v787
      %v818 = vsel %vm588, %v817, %v795
      %v819 = vsel %vm590, %v818, %v803
      %v820 = vsel %vm592, %v819, %v811
      %v821 = vsel %vm594, %v820, %v815
      %v822 = vsel %vm596, %v821, %v757
      %824 = vrot.lane.b32.xlu0 %v459, 120
      %v825 = vpop.permute.xlu0 %824
      %826 = vrot.lane.b32.xlu0 %v450, 120
      %v827 = vpop.permute.xlu0 %826
      %v829 = vsel %vm476, %v825, 0
      %v832 = vsel %vm476, %v827, 0
      %834 = vmatprep.subr.bf16.mxu0 0
      %835 = vmatpush1.bf16.xpose.msra.mxu0 %v832
      %836 = vmatprep.subr.bf16.mxu0 0
      %837 = vmatpush1.bf16.xpose.msra.mxu0 0
      %838 = vmatprep.subr.bf16.mxu0 0
      %839 = vmatpush1.bf16.xpose.msra.mxu0 0
      %840 = vmatprep.subr.bf16.mxu0 0
      %841 = vmatpush1.bf16.xpose.msra.mxu0 0
      %842 = vmatprep.subr.bf16.mxu0 0
      %843 = vmatpush1.bf16.xpose.msra.mxu0 0
      %844 = vmatprep.subr.bf16.mxu0 0
      %845 = vmatpush1.bf16.xpose.msra.mxu0 0
      %846 = vmatprep.subr.bf16.mxu0 0
      %847 = vmatpush1.bf16.xpose.msra.mxu0 0
      %848 = vmatprep.subr.bf16.mxu0 0
      %849 = vmatpush1.bf16.xpose.msra.mxu0 0
      %850 = vmatprep.subr.bf16.mxu0 0
      %851 = vmatpush1.bf16.xpose.msra.mxu0 0
      %852 = vmatprep.subr.bf16.mxu0 0
      %853 = vmatpush1.bf16.xpose.msra.mxu0 0
      %854 = vmatprep.subr.bf16.mxu0 0
      %855 = vmatpush1.bf16.xpose.msra.mxu0 0
      %856 = vmatprep.subr.bf16.mxu0 0
      %857 = vmatpush1.bf16.xpose.msra.mxu0 0
      %858 = vmatprep.subr.bf16.mxu0 0
      %859 = vmatpush1.bf16.xpose.msra.mxu0 0
      %860 = vmatprep.subr.bf16.mxu0 0
      %861 = vmatpush1.bf16.xpose.msra.mxu0 0
      %862 = vmatprep.subr.bf16.mxu0 0
      %863 = vmatpush1.bf16.xpose.msra.mxu0 0
      %864 = vmatprep.subr.bf16.mxu0 0
      %865 = vmatpush1.bf16.xpose.msra.mxu0 0
      %866 = vmatprep.mubr.bf16.mxu0 0
      %867 = vmatmul.mubr.bf16.gmra.mrb[0].mxu0 %v829
      %v868 = vpop.f32.mrb[0].mxu0
      %v869 = vadd.f32 %v822, %v868
      %v870 = vpop.f32.mrb[0].mxu0
      %v871 = vpop.f32.mrb[0].mxu0
      %v872 = vpop.f32.mrb[0].mxu0
      %873 = vdwg.mxu0
      %v874 = vsel %vm644, %v869, -inf
      %875 = vmax.xlane.f32.xlu0 %v874
      %v876 = vpop.xlane.xlu0 %875
      %v877 = vsub.f32 %v869, %v876
      %v878 = vmul.f32 %v877, 1.442695
      %v879 = vpow.pop %v878
      %v880 = vsel %vm644, %v879, 0.0
      %881 = vadd.xlane.f32.xlu0 %v880
      %v882 = vpop.xlane.xlu0 %881
      %v883 = vrcp.pop %v882
      %v884 = vmul.f32 %v879, %v883
      %v885 = vpack.c.bf16 %v884, %v884
      %886 = vrot.lane.b32.xlu0 %v450, 88
      %v887 = vpop.permute.xlu0 %886
      %v890 = vsel %vm644, %v885, 0
      %892 = vmatprep.subr.bf16.mxu0 0
      %893 = vmatpush1.bf16.msra.mxu0 %v887
      %894 = vmatprep.subr.bf16.mxu0 0
      %895 = vmatpush1.bf16.msra.mxu0 0
      %896 = vmatprep.subr.bf16.mxu0 0
      %897 = vmatpush1.bf16.msra.mxu0 0
      %898 = vmatprep.subr.bf16.mxu0 0
      %899 = vmatpush1.bf16.msra.mxu0 0
      %900 = vmatprep.subr.bf16.mxu0 0
      %901 = vmatpush1.bf16.msra.mxu0 0
      %902 = vmatprep.subr.bf16.mxu0 0
      %903 = vmatpush1.bf16.msra.mxu0 0
      %904 = vmatprep.subr.bf16.mxu0 0
      %905 = vmatpush1.bf16.msra.mxu0 0
      %906 = vmatprep.subr.bf16.mxu0 0
      %907 = vmatpush1.bf16.msra.mxu0 0
      %908 = vmatprep.subr.bf16.mxu0 0
      %909 = vmatpush1.bf16.msra.mxu0 0
      %910 = vmatprep.subr.bf16.mxu0 0
      %911 = vmatpush1.bf16.msra.mxu0 0
      %912 = vmatprep.subr.bf16.mxu0 0
      %913 = vmatpush1.bf16.msra.mxu0 0
      %914 = vmatprep.subr.bf16.mxu0 0
      %915 = vmatpush1.bf16.msra.mxu0 0
      %916 = vmatprep.subr.bf16.mxu0 0
      %917 = vmatpush1.bf16.msra.mxu0 0
      %918 = vmatprep.subr.bf16.mxu0 0
      %919 = vmatpush1.bf16.msra.mxu0 0
      %920 = vmatprep.subr.bf16.mxu0 0
      %921 = vmatpush1.bf16.msra.mxu0 0
      %922 = vmatprep.subr.bf16.mxu0 0
      %923 = vmatpush1.bf16.msra.mxu0 0
      %924 = vmatprep.mubr.bf16.mxu0 0
      %925 = vmatmul.mubr.bf16.gmra.mrb[0].mxu0 %v890
      %v926 = vpop.f32.mrb[0].mxu0
      %v927 = vadd.f32 0.0, %v926
      %v928 = vpop.f32.mrb[0].mxu0
      %v929 = vpop.f32.mrb[0].mxu0
      %v930 = vpop.f32.mrb[0].mxu0
      %931 = vdwg.mxu0
      %933 = vrot.lane.b32.xlu0 %v927, 8
      %v934 = vpop.permute.xlu0 %933
      %vm936 = vcmask 130112
      %937 = vst.msk [vmem:[#allocation2] sm:$0xff] %vm936, %v934
      %s938 = scalar_lea.vmem %s2, 16
      %v939 = vld [vmem:[%s938] sm:$0xf]
      %v940 = vld [vmem:[%s938 + $0x4] sm:$0xf]
      %941 = vrot.lane.b32.xlu0 %v468, 112
      %v942 = vpop.permute.xlu0 %941
      %v945 = vunpack.c.l.b16 %v939
      %v946 = vunpack.c.l.b16 %v940
      %v947 = vpack.c.b16 %v946, %v945
      %v949 = vsel %vm476, %v942, 0
      %v952 = vsel %vm476, %v947, 0
      %954 = vmatprep.subr.bf16.mxu0 0
      %955 = vmatpush1.bf16.xpose.msra.mxu0 %v952
      %956 = vmatprep.subr.bf16.mxu0 0
      %957 = vmatpush1.bf16.xpose.msra.mxu0 0
      %958 = vmatprep.subr.bf16.mxu0 0
      %959 = vmatpush1.bf16.xpose.msra.mxu0 0
      %960 = vmatprep.subr.bf16.mxu0 0
      %961 = vmatpush1.bf16.xpose.msra.mxu0 0
      %962 = vmatprep.subr.bf16.mxu0 0
      %963 = vmatpush1.bf16.xpose.msra.mxu0 0
      %964 = vmatprep.subr.bf16.mxu0 0
      %965 = vmatpush1.bf16.xpose.msra.mxu0 0
      %966 = vmatprep.subr.bf16.mxu0 0
      %967 = vmatpush1.bf16.xpose.msra.mxu0 0
      %968 = vmatprep.subr.bf16.mxu0 0
      %969 = vmatpush1.bf16.xpose.msra.mxu0 0
      %970 = vmatprep.subr.bf16.mxu0 0
      %971 = vmatpush1.bf16.xpose.msra.mxu0 0
      %972 = vmatprep.subr.bf16.mxu0 0
      %973 = vmatpush1.bf16.xpose.msra.mxu0 0
      %974 = vmatprep.subr.bf16.mxu0 0
      %975 = vmatpush1.bf16.xpose.msra.mxu0 0
      %976 = vmatprep.subr.bf16.mxu0 0
      %977 = vmatpush1.bf16.xpose.msra.mxu0 0
      %978 = vmatprep.subr.bf16.mxu0 0
      %979 = vmatpush1.bf16.xpose.msra.mxu0 0
      %980 = vmatprep.subr.bf16.mxu0 0
      %981 = vmatpush1.bf16.xpose.msra.mxu0 0
      %982 = vmatprep.subr.bf16.mxu0 0
      %983 = vmatpush1.bf16.xpose.msra.mxu0 0
      %984 = vmatprep.subr.bf16.mxu0 0
      %985 = vmatpush1.bf16.xpose.msra.mxu0 0
      %986 = vmatprep.mubr.bf16.mxu0 0
      %987 = vmatmul.mubr.bf16.gmra.mrb[0].mxu0 %v949
      %v988 = vpop.f32.mrb[0].mxu0
      %v989 = vadd.f32 0.0, %v988
      %v990 = vpop.f32.mrb[0].mxu0
      %v991 = vpop.f32.mrb[0].mxu0
      %v992 = vpop.f32.mrb[0].mxu0
      %993 = vdwg.mxu0
      %995 = vrot.lane.b32.xlu0 %v989, 121
      %v996 = vpop.permute.xlu0 %995
      %v998 = vrot.slane %v989, 1
      %999 = vrot.lane.b32.xlu0 %v998, 10
      %v1000 = vpop.permute.xlu0 %999
      %v1002 = vsel %vm531, %v996, 0.0
      %v1003 = vsel %vm533, %v1002, %v1000
      %1004 = vrot.lane.b32.xlu0 %v989, 122
      %v1005 = vpop.permute.xlu0 %1004
      %1007 = vrot.lane.b32.xlu0 %v998, 11
      %v1008 = vpop.permute.xlu0 %1007
      %v1010 = vsel %vm533, %v1005, 0.0
      %v1011 = vsel %vm542, %v1010, %v1008
      %1012 = vrot.lane.b32.xlu0 %v989, 123
      %v1013 = vpop.permute.xlu0 %1012
      %1015 = vrot.lane.b32.xlu0 %v998, 12
      %v1016 = vpop.permute.xlu0 %1015
      %v1018 = vsel %vm542, %v1013, 0.0
      %v1019 = vsel %vm551, %v1018, %v1016
      %1020 = vrot.lane.b32.xlu0 %v989, 124
      %v1021 = vpop.permute.xlu0 %1020
      %1023 = vrot.lane.b32.xlu0 %v998, 13
      %v1024 = vpop.permute.xlu0 %1023
      %v1026 = vsel %vm551, %v1021, 0.0
      %v1027 = vsel %vm560, %v1026, %v1024
      %1028 = vrot.lane.b32.xlu0 %v989, 125
      %v1029 = vpop.permute.xlu0 %1028
      %1031 = vrot.lane.b32.xlu0 %v998, 14
      %v1032 = vpop.permute.xlu0 %1031
      %v1034 = vsel %vm560, %v1029, 0.0
      %v1035 = vsel %vm569, %v1034, %v1032
      %1036 = vrot.lane.b32.xlu0 %v989, 126
      %v1037 = vpop.permute.xlu0 %1036
      %1039 = vrot.lane.b32.xlu0 %v998, 15
      %v1040 = vpop.permute.xlu0 %1039
      %v1042 = vsel %vm569, %v1037, 0.0
      %v1043 = vsel %vm578, %v1042, %v1040
      %1044 = vrot.lane.b32.xlu0 %v989, 127
      %v1045 = vpop.permute.xlu0 %1044
      %v1047 = vsel %vm578, %v1045, 0.0
      %v1048 = vsel %vm584, %v1003, %v1011
      %v1049 = vsel %vm586, %v1048, %v1019
      %v1050 = vsel %vm588, %v1049, %v1027
      %v1051 = vsel %vm590, %v1050, %v1035
      %v1052 = vsel %vm592, %v1051, %v1043
      %v1053 = vsel %vm594, %v1052, %v1047
      %v1054 = vsel %vm596, %v1053, %v989
      %1055 = vrot.lane.b32.xlu0 %v459, 112
      %v1056 = vpop.permute.xlu0 %1055
      %1057 = vrot.lane.b32.xlu0 %v450, 112
      %v1058 = vpop.permute.xlu0 %1057
      %v1060 = vsel %vm476, %v1056, 0
      %v1063 = vsel %vm476, %v1058, 0
      %1065 = vmatprep.subr.bf16.mxu0 0
      %1066 = vmatpush1.bf16.xpose.msra.mxu0 %v1063
      %1067 = vmatprep.subr.bf16.mxu0 0
      %1068 = vmatpush1.bf16.xpose.msra.mxu0 0
      %1069 = vmatprep.subr.bf16.mxu0 0
      %1070 = vmatpush1.bf16.xpose.msra.mxu0 0
      %1071 = vmatprep.subr.bf16.mxu0 0
      %1072 = vmatpush1.bf16.xpose.msra.mxu0 0
      %1073 = vmatprep.subr.bf16.mxu0 0
      %1074 = vmatpush1.bf16.xpose.msra.mxu0 0
      %1075 = vmatprep.subr.bf16.mxu0 0
      %1076 = vmatpush1.bf16.xpose.msra.mxu0 0
      %1077 = vmatprep.subr.bf16.mxu0 0
      %1078 = vmatpush1.bf16.xpose.msra.mxu0 0
      %1079 = vmatprep.subr.bf16.mxu0 0
      %1080 = vmatpush1.bf16.xpose.msra.mxu0 0
      %1081 = vmatprep.subr.bf16.mxu0 0
      %1082 = vmatpush1.bf16.xpose.msra.mxu0 0
      %1083 = vmatprep.subr.bf16.mxu0 0
      %1084 = vmatpush1.bf16.xpose.msra.mxu0 0
      %1085 = vmatprep.subr.bf16.mxu0 0
      %1086 = vmatpush1.bf16.xpose.msra.mxu0 0
      %1087 = vmatprep.subr.bf16.mxu0 0
      %1088 = vmatpush1.bf16.xpose.msra.mxu0 0
      %1089 = vmatprep.subr.bf16.mxu0 0
      %1090 = vmatpush1.bf16.xpose.msra.mxu0 0
      %1091 = vmatprep.subr.bf16.mxu0 0
      %1092 = vmatpush1.bf16.xpose.msra.mxu0 0
      %1093 = vmatprep.subr.bf16.mxu0 0
      %1094 = vmatpush1.bf16.xpose.msra.mxu0 0
      %1095 = vmatprep.subr.bf16.mxu0 0
      %1096 = vmatpush1.bf16.xpose.msra.mxu0 0
      %1097 = vmatprep.mubr.bf16.mxu0 0
      %1098 = vmatmul.mubr.bf16.gmra.mrb[0].mxu0 %v1060
      %v1099 = vpop.f32.mrb[0].mxu0
      %v1100 = vadd.f32 %v1054, %v1099
      %v1101 = vpop.f32.mrb[0].mxu0
      %v1102 = vpop.f32.mrb[0].mxu0
      %v1103 = vpop.f32.mrb[0].mxu0
      %1104 = vdwg.mxu0
      %v1105 = vsel %vm644, %v1100, -inf
      %1106 = vmax.xlane.f32.xlu0 %v1105
      %v1107 = vpop.xlane.xlu0 %1106
      %v1108 = vsub.f32 %v1100, %v1107
      %v1109 = vmul.f32 %v1108, 1.442695
      %v1110 = vpow.pop %v1109
      %v1111 = vsel %vm644, %v1110, 0.0
      %1112 = vadd.xlane.f32.xlu0 %v1111
      %v1113 = vpop.xlane.xlu0 %1112
      %v1114 = vrcp.pop %v1113
      %v1115 = vmul.f32 %v1110, %v1114
      %v1116 = vpack.c.bf16 %v1115, %v1115
      %1117 = vrot.lane.b32.xlu0 %v450, 80
      %v1118 = vpop.permute.xlu0 %1117
      %v1121 = vsel %vm644, %v1116, 0
      %1123 = vmatprep.subr.bf16.mxu0 0
      %1124 = vmatpush1.bf16.msra.mxu0 %v1118
      %1125 = vmatprep.subr.bf16.mxu0 0
      %1126 = vmatpush1.bf16.msra.mxu0 0
      %1127 = vmatprep.subr.bf16.mxu0 0
      %1128 = vmatpush1.bf16.msra.mxu0 0
      %1129 = vmatprep.subr.bf16.mxu0 0
      %1130 = vmatpush1.bf16.msra.mxu0 0
      %1131 = vmatprep.subr.bf16.mxu0 0
      %1132 = vmatpush1.bf16.msra.mxu0 0
      %1133 = vmatprep.subr.bf16.mxu0 0
      %1134 = vmatpush1.bf16.msra.mxu0 0
      %1135 = vmatprep.subr.bf16.mxu0 0
      %1136 = vmatpush1.bf16.msra.mxu0 0
      %1137 = vmatprep.subr.bf16.mxu0 0
      %1138 = vmatpush1.bf16.msra.mxu0 0
      %1139 = vmatprep.subr.bf16.mxu0 0
      %1140 = vmatpush1.bf16.msra.mxu0 0
      %1141 = vmatprep.subr.bf16.mxu0 0
      %1142 = vmatpush1.bf16.msra.mxu0 0
      %1143 = vmatprep.subr.bf16.mxu0 0
      %1144 = vmatpush1.bf16.msra.mxu0 0
      %1145 = vmatprep.subr.bf16.mxu0 0
      %1146 = vmatpush1.bf16.msra.mxu0 0
      %1147 = vmatprep.subr.bf16.mxu0 0
      %1148 = vmatpush1.bf16.msra.mxu0 0
      %1149 = vmatprep.subr.bf16.mxu0 0
      %1150 = vmatpush1.bf16.msra.mxu0 0
      %1151 = vmatprep.subr.bf16.mxu0 0
      %1152 = vmatpush1.bf16.msra.mxu0 0
      %1153 = vmatprep.subr.bf16.mxu0 0
      %1154 = vmatpush1.bf16.msra.mxu0 0
      %1155 = vmatprep.mubr.bf16.mxu0 0
      %1156 = vmatmul.mubr.bf16.gmra.mrb[0].mxu0 %v1121
      %v1157 = vpop.f32.mrb[0].mxu0
      %v1158 = vadd.f32 0.0, %v1157
      %v1159 = vpop.f32.mrb[0].mxu0
      %v1160 = vpop.f32.mrb[0].mxu0
      %v1161 = vpop.f32.mrb[0].mxu0
      %1162 = vdwg.mxu0
      %1164 = vrot.lane.b32.xlu0 %v1158, 16
      %v1165 = vpop.permute.xlu0 %1164
      %vm1167 = vcmask 195712
      %1168 = vst.msk [vmem:[#allocation2] sm:$0xff] %vm1167, %v1165
      %s1169 = scalar_lea.vmem %s2, 24
      %v1170 = vld [vmem:[%s1169] sm:$0xf]
      %v1171 = vld [vmem:[%s1169 + $0x4] sm:$0xf]
      %1172 = vrot.lane.b32.xlu0 %v468, 104
      %v1173 = vpop.permute.xlu0 %1172
      %v1176 = vunpack.c.l.b16 %v1170
      %v1177 = vunpack.c.l.b16 %v1171
      %v1178 = vpack.c.b16 %v1177, %v1176
      %v1180 = vsel %vm476, %v1173, 0
      %v1183 = vsel %vm476, %v1178, 0
      %1185 = vmatprep.subr.bf16.mxu0 0
      %1186 = vmatpush1.bf16.xpose.msra.mxu0 %v1183
      %1187 = vmatprep.subr.bf16.mxu0 0
      %1188 = vmatpush1.bf16.xpose.msra.mxu0 0
      %1189 = vmatprep.subr.bf16.mxu0 0
      %1190 = vmatpush1.bf16.xpose.msra.mxu0 0
      %1191 = vmatprep.subr.bf16.mxu0 0
      %1192 = vmatpush1.bf16.xpose.msra.mxu0 0
      %1193 = vmatprep.subr.bf16.mxu0 0
      %1194 = vmatpush1.bf16.xpose.msra.mxu0 0
      %1195 = vmatprep.subr.bf16.mxu0 0
      %1196 = vmatpush1.bf16.xpose.msra.mxu0 0
      %1197 = vmatprep.subr.bf16.mxu0 0
      %1198 = vmatpush1.bf16.xpose.msra.mxu0 0
      %1199 = vmatprep.subr.bf16.mxu0 0
      %1200 = vmatpush1.bf16.xpose.msra.mxu0 0
      %1201 = vmatprep.subr.bf16.mxu0 0
      %1202 = vmatpush1.bf16.xpose.msra.mxu0 0
      %1203 = vmatprep.subr.bf16.mxu0 0
      %1204 = vmatpush1.bf16.xpose.msra.mxu0 0
      %1205 = vmatprep.subr.bf16.mxu0 0
      %1206 = vmatpush1.bf16.xpose.msra.mxu0 0
      %1207 = vmatprep.subr.bf16.mxu0 0
      %1208 = vmatpush1.bf16.xpose.msra.mxu0 0
      %1209 = vmatprep.subr.bf16.mxu0 0
      %1210 = vmatpush1.bf16.xpose.msra.mxu0 0
      %1211 = vmatprep.subr.bf16.mxu0 0
      %1212 = vmatpush1.bf16.xpose.msra.mxu0 0
      %1213 = vmatprep.subr.bf16.mxu0 0
      %1214 = vmatpush1.bf16.xpose.msra.mxu0 0
      %1215 = vmatprep.subr.bf16.mxu0 0
      %1216 = vmatpush1.bf16.xpose.msra.mxu0 0
      %1217 = vmatprep.mubr.bf16.mxu0 0
      %1218 = vmatmul.mubr.bf16.gmra.mrb[0].mxu0 %v1180
      %v1219 = vpop.f32.mrb[0].mxu0
      %v1220 = vadd.f32 0.0, %v1219
      %v1221 = vpop.f32.mrb[0].mxu0
      %v1222 = vpop.f32.mrb[0].mxu0
      %v1223 = vpop.f32.mrb[0].mxu0
      %1224 = vdwg.mxu0
      %1226 = vrot.lane.b32.xlu0 %v1220, 121
      %v1227 = vpop.permute.xlu0 %1226
      %v1229 = vrot.slane %v1220, 1
      %1230 = vrot.lane.b32.xlu0 %v1229, 10
      %v1231 = vpop.permute.xlu0 %1230
      %v1233 = vsel %vm531, %v1227, 0.0
      %v1234 = vsel %vm533, %v1233, %v1231
      %1235 = vrot.lane.b32.xlu0 %v1220, 122
      %v1236 = vpop.permute.xlu0 %1235
      %1238 = vrot.lane.b32.xlu0 %v1229, 11
      %v1239 = vpop.permute.xlu0 %1238
      %v1241 = vsel %vm533, %v1236, 0.0
      %v1242 = vsel %vm542, %v1241, %v1239
      %1243 = vrot.lane.b32.xlu0 %v1220, 123
      %v1244 = vpop.permute.xlu0 %1243
      %1246 = vrot.lane.b32.xlu0 %v1229, 12
      %v1247 = vpop.permute.xlu0 %1246
      %v1249 = vsel %vm542, %v1244, 0.0
      %v1250 = vsel %vm551, %v1249, %v1247
      %1251 = vrot.lane.b32.xlu0 %v1220, 124
      %v1252 = vpop.permute.xlu0 %1251
      %1254 = vrot.lane.b32.xlu0 %v1229, 13
      %v1255 = vpop.permute.xlu0 %1254
      %v1257 = vsel %vm551, %v1252, 0.0
      %v1258 = vsel %vm560, %v1257, %v1255
      %1259 = vrot.lane.b32.xlu0 %v1220, 125
      %v1260 = vpop.permute.xlu0 %1259
      %1262 = vrot.lane.b32.xlu0 %v1229, 14
      %v1263 = vpop.permute.xlu0 %1262
      %v1265 = vsel %vm560, %v1260, 0.0
      %v1266 = vsel %vm569, %v1265, %v1263
      %1267 = vrot.lane.b32.xlu0 %v1220, 126
      %v1268 = vpop.permute.xlu0 %1267
      %1270 = vrot.lane.b32.xlu0 %v1229, 15
      %v1271 = vpop.permute.xlu0 %1270
      %v1273 = vsel %vm569, %v1268, 0.0
      %v1274 = vsel %vm578, %v1273, %v1271
      %1275 = vrot.lane.b32.xlu0 %v1220, 127
      %v1276 = vpop.permute.xlu0 %1275
      %v1278 = vsel %vm578, %v1276, 0.0
      %v1279 = vsel %vm584, %v1234, %v1242
      %v1280 = vsel %vm586, %v1279, %v1250
      %v1281 = vsel %vm588, %v1280, %v1258
      %v1282 = vsel %vm590, %v1281, %v1266
      %v1283 = vsel %vm592, %v1282, %v1274
      %v1284 = vsel %vm594, %v1283, %v1278
      %v1285 = vsel %vm596, %v1284, %v1220
      %1286 = vrot.lane.b32.xlu0 %v459, 104
      %v1287 = vpop.permute.xlu0 %1286
      %1288 = vrot.lane.b32.xlu0 %v450, 104
      %v1289 = vpop.permute.xlu0 %1288
      %v1291 = vsel %vm476, %v1287, 0
      %v1294 = vsel %vm476, %v1289, 0
      %1296 = vmatprep.subr.bf16.mxu0 0
      %1297 = vmatpush1.bf16.xpose.msra.mxu0 %v1294
      %1298 = vmatprep.subr.bf16.mxu0 0
      %1299 = vmatpush1.bf16.xpose.msra.mxu0 0
      %1300 = vmatprep.subr.bf16.mxu0 0
      %1301 = vmatpush1.bf16.xpose.msra.mxu0 0
      %1302 = vmatprep.subr.bf16.mxu0 0
      %1303 = vmatpush1.bf16.xpose.msra.mxu0 0
      %1304 = vmatprep.subr.bf16.mxu0 0
      %1305 = vmatpush1.bf16.xpose.msra.mxu0 0
      %1306 = vmatprep.subr.bf16.mxu0 0
      %1307 = vmatpush1.bf16.xpose.msra.mxu0 0
      %1308 = vmatprep.subr.bf16.mxu0 0
      %1309 = vmatpush1.bf16.xpose.msra.mxu0 0
      %1310 = vmatprep.subr.bf16.mxu0 0
      %1311 = vmatpush1.bf16.xpose.msra.mxu0 0
      %1312 = vmatprep.subr.bf16.mxu0 0
      %1313 = vmatpush1.bf16.xpose.msra.mxu0 0
      %1314 = vmatprep.subr.bf16.mxu0 0
      %1315 = vmatpush1.bf16.xpose.msra.mxu0 0
      %1316 = vmatprep.subr.bf16.mxu0 0
      %1317 = vmatpush1.bf16.xpose.msra.mxu0 0
      %1318 = vmatprep.subr.bf16.mxu0 0
      %1319 = vmatpush1.bf16.xpose.msra.mxu0 0
      %1320 = vmatprep.subr.bf16.mxu0 0
      %1321 = vmatpush1.bf16.xpose.msra.mxu0 0
      %1322 = vmatprep.subr.bf16.mxu0 0
      %1323 = vmatpush1.bf16.xpose.msra.mxu0 0
      %1324 = vmatprep.subr.bf16.mxu0 0
      %1325 = vmatpush1.bf16.xpose.msra.mxu0 0
      %1326 = vmatprep.subr.bf16.mxu0 0
      %1327 = vmatpush1.bf16.xpose.msra.mxu0 0
      %1328 = vmatprep.mubr.bf16.mxu0 0
      %1329 = vmatmul.mubr.bf16.gmra.mrb[0].mxu0 %v1291
      %v1330 = vpop.f32.mrb[0].mxu0
      %v1331 = vadd.f32 %v1285, %v1330
      %v1332 = vpop.f32.mrb[0].mxu0
      %v1333 = vpop.f32.mrb[0].mxu0
      %v1334 = vpop.f32.mrb[0].mxu0
      %1335 = vdwg.mxu0
      %v1336 = vsel %vm644, %v1331, -inf
      %1337 = vmax.xlane.f32.xlu0 %v1336
      %v1338 = vpop.xlane.xlu0 %1337
      %v1339 = vsub.f32 %v1331, %v1338
      %v1340 = vmul.f32 %v1339, 1.442695
      %v1341 = vpow.pop %v1340
      %v1342 = vsel %vm644, %v1341, 0.0
      %1343 = vadd.xlane.f32.xlu0 %v1342
      %v1344 = vpop.xlane.xlu0 %1343
      %v1345 = vrcp.pop %v1344
      %v1346 = vmul.f32 %v1341, %v1345
      %v1347 = vpack.c.bf16 %v1346, %v1346
      %1348 = vrot.lane.b32.xlu0 %v450, 72
      %v1349 = vpop.permute.xlu0 %1348
      %v1352 = vsel %vm644, %v1347, 0
      %1354 = vmatprep.subr.bf16.mxu0 0
      %1355 = vmatpush1.bf16.msra.mxu0 %v1349
      %1356 = vmatprep.subr.bf16.mxu0 0
      %1357 = vmatpush1.bf16.msra.mxu0 0
      %1358 = vmatprep.subr.bf16.mxu0 0
      %1359 = vmatpush1.bf16.msra.mxu0 0
      %1360 = vmatprep.subr.bf16.mxu0 0
      %1361 = vmatpush1.bf16.msra.mxu0 0
      %1362 = vmatprep.subr.bf16.mxu0 0
      %1363 = vmatpush1.bf16.msra.mxu0 0
      %1364 = vmatprep.subr.bf16.mxu0 0
      %1365 = vmatpush1.bf16.msra.mxu0 0
      %1366 = vmatprep.subr.bf16.mxu0 0
      %1367 = vmatpush1.bf16.msra.mxu0 0
      %1368 = vmatprep.subr.bf16.mxu0 0
      %1369 = vmatpush1.bf16.msra.mxu0 0
      %1370 = vmatprep.subr.bf16.mxu0 0
      %1371 = vmatpush1.bf16.msra.mxu0 0
      %1372 = vmatprep.subr.bf16.mxu0 0
      %1373 = vmatpush1.bf16.msra.mxu0 0
      %1374 = vmatprep.subr.bf16.mxu0 0
      %1375 = vmatpush1.bf16.msra.mxu0 0
      %1376 = vmatprep.subr.bf16.mxu0 0
      %1377 = vmatpush1.bf16.msra.mxu0 0
      %1378 = vmatprep.subr.bf16.mxu0 0
      %1379 = vmatpush1.bf16.msra.mxu0 0
      %1380 = vmatprep.subr.bf16.mxu0 0
      %1381 = vmatpush1.bf16.msra.mxu0 0
      %1382 = vmatprep.subr.bf16.mxu0 0
      %1383 = vmatpush1.bf16.msra.mxu0 0
      %1384 = vmatprep.subr.bf16.mxu0 0
      %1385 = vmatpush1.bf16.msra.mxu0 0
      %1386 = vmatprep.mubr.bf16.mxu0 0
      %1387 = vmatmul.mubr.bf16.gmra.mrb[0].mxu0 %v1352
      %v1388 = vpop.f32.mrb[0].mxu0
      %v1389 = vadd.f32 0.0, %v1388
      %v1390 = vpop.f32.mrb[0].mxu0
      %v1391 = vpop.f32.mrb[0].mxu0
      %v1392 = vpop.f32.mrb[0].mxu0
      %1393 = vdwg.mxu0
      %1395 = vrot.lane.b32.xlu0 %v1389, 24
      %v1396 = vpop.permute.xlu0 %1395
      %vm1398 = vcmask 261312
      %1399 = vst.msk [vmem:[#allocation2] sm:$0xff] %vm1398, %v1396
      %v1400 = vld [vmem:[#allocation2] sm:$0xff]
      %v1401 = vpack.c.bf16 %v1400, %v1400
      %v1402 = vld [vmem:[%s5] sm:$0xf]
      %v1403 = vld [vmem:[%s5 + $0x4] sm:$0xf]
      %v1404 = vld [vmem:[%s5 + $0x8] sm:$0xf]
      %v1405 = vld [vmem:[%s5 + $0xc] sm:$0xf]
      %v1410 = vunpack.c.l.b16 %v1402
      %v1411 = vunpack.c.l.b16 %v1403
      %v1412 = vunpack.c.l.b16 %v1404
      %v1413 = vunpack.c.l.b16 %v1405
      %v1414 = vpack.c.b16 %v1411, %v1410
      %v1415 = vpack.c.b16 %v1413, %v1412
      %v1419 = vsel %vm341, %v1401, 0
      %1421 = vmatprep.subr.bf16.mxu0 0
      %1422 = vmatpush1.bf16.msra.mxu0 %v1414
      %1423 = vmatprep.subr.bf16.mxu0 0
      %1424 = vmatpush1.bf16.msra.mxu0 %v1415
      %1425 = vmatprep.subr.bf16.mxu0 0
      %1426 = vmatpush1.bf16.msra.mxu0 0
      %1427 = vmatprep.subr.bf16.mxu0 0
      %1428 = vmatpush1.bf16.msra.mxu0 0
      %1429 = vmatprep.subr.bf16.mxu0 0
      %1430 = vmatpush1.bf16.msra.mxu0 0
      %1431 = vmatprep.subr.bf16.mxu0 0
      %1432 = vmatpush1.bf16.msra.mxu0 0
      %1433 = vmatprep.subr.bf16.mxu0 0
      %1434 = vmatpush1.bf16.msra.mxu0 0
      %1435 = vmatprep.subr.bf16.mxu0 0
      %1436 = vmatpush1.bf16.msra.mxu0 0
      %1437 = vmatprep.subr.bf16.mxu0 0
      %1438 = vmatpush1.bf16.msra.mxu0 0
      %1439 = vmatprep.subr.bf16.mxu0 0
      %1440 = vmatpush1.bf16.msra.mxu0 0
      %1441 = vmatprep.subr.bf16.mxu0 0
      %1442 = vmatpush1.bf16.msra.mxu0 0
      %1443 = vmatprep.subr.bf16.mxu0 0
      %1444 = vmatpush1.bf16.msra.mxu0 0
      %1445 = vmatprep.subr.bf16.mxu0 0
      %1446 = vmatpush1.bf16.msra.mxu0 0
      %1447 = vmatprep.subr.bf16.mxu0 0
      %1448 = vmatpush1.bf16.msra.mxu0 0
      %1449 = vmatprep.subr.bf16.mxu0 0
      %1450 = vmatpush1.bf16.msra.mxu0 0
      %1451 = vmatprep.subr.bf16.mxu0 0
      %1452 = vmatpush1.bf16.msra.mxu0 0
      %1453 = vmatprep.mubr.bf16.mxu0 0
      %1454 = vmatmul.mubr.bf16.gmra.mrb[0].mxu0 %v1419
      %v1455 = vpop.f32.mrb[0].mxu0
      %v1456 = vadd.f32 0.0, %v1455
      %v1457 = vpop.f32.mrb[0].mxu0
      %v1458 = vpop.f32.mrb[0].mxu0
      %v1459 = vpop.f32.mrb[0].mxu0
      %1460 = vdwg.mxu0
      %1461 = vst.msk [vmem:[%s320] sm:$0xff] %vm341, %v1456
      %p1462 = scmp.lt.s32.totalorder %s19, 1
      %s1463 = scalar_select %p1462, %s19, 1
      %s1464 = smul.addr %s1463, 8
      %s1465 = scalar_lea.vmem %s8, %s1464
      // Predicated region
      $region53: #{multi_head_attention_xl.1} parent=51 // pred_check
        %p1466 = pneg %p215
      $region54: #{multi_head_attention_xl.1} parent=51 // pred_check_branch
        %1468 = sbr.rel (%p1466) target = $region56
      $region55: #{multi_head_attention_xl.1} parent=51 // pred_region
        _
      $region56: #{multi_head_attention_xl.1} parent=51 // pred_fallthru
        _
    $region52: #{multi_head_attention_xl.1} parent=5 // pred_fallthru
      _
    %p1469 = scmp.le.s32.totalorder 2, %s14
    // Predicated region
    $region57: #{multi_head_attention_xl.1} parent=5 // pred_check
      %p1470 = pneg %p1469
    $region58: #{multi_head_attention_xl.1} parent=5 // pred_check_branch
      %1472 = sbr.rel (%p1470) target = $region60
    $region59: #{multi_head_attention_xl.1} parent=5 // pred_region
      %s1473 = ssub.s32 %s14, 2
      // Predicated region
      $region61: #{multi_head_attention_xl.1} parent=59 // pred_check
        %p1474 = pneg %p221
      $region62: #{multi_head_attention_xl.1} parent=59 // pred_check_branch
        %1476 = sbr.rel (%p1474) target = $region64
      $region63: #{multi_head_attention_xl.1} parent=59 // pred_region
        %p1477 = scmp.lt.s32.totalorder %s20, 1
        %s1478 = scalar_select %p1477, %s20, 1
        %s1479 = smul.addr %s1478, 8
        %s1480 = scalar_lea.vmem %s8, %s1479
      $region64: #{multi_head_attention_xl.1} parent=59 // pred_fallthru
        _
    $region60: #{multi_head_attention_xl.1} parent=5 // pred_fallthru
      _
  $region6: #{multi_head_attention_xl.1} parent=0 // loop_footer
    %s18 = sadd.s32 1, %s14
  $region7: #{multi_head_attention_xl.1} parent=0 // loop_footer_branch
    %13 = sbr.rel target = $region3
  $region8: #{multi_head_attention_xl.1} parent=0 // loop_exit
    _

</llo_original>
